<compile_context>
chip_gen: v6e
topology: v6e:2x2x1
jax: 0.10.0
libtpu: 0.0.40
codegen_flags: <defaults>
</compile_context>

<pallas_src>
import functools

import jax
import jax.numpy as jnp
from jax import lax
from jax.experimental import pallas as pl
from jax.experimental.pallas import tpu as pltpu


# --------------------------------------------------------------------------- #
# Kernels
# --------------------------------------------------------------------------- #
def _local_inference_kernel_single(s1_ref, s2_ref, o1_ref, o2_ref, *, mxu_dtype):
    """Fast path: the whole L1 fits in one tile (nq == 1). grid = (B,)."""
    s1 = s1_ref[0]                       # (L1, D)
    s2 = s2_ref[0]                       # (L2, D)
    if mxu_dtype is not None:
        s1 = s1.astype(mxu_dtype)
        s2 = s2.astype(mxu_dtype)

    # e = s1 @ s2^T as an NT contraction (no explicit transpose), f32 result.
    e = lax.dot_general(s1, s2, (((1,), (1,)), ((), ())),
                        preferred_element_type=jnp.float32)      # (L1, L2)

    # softmax over L2 (torch dim=2) -> seq_1_hat (post-matmul normalization).
    m2 = jnp.max(e, axis=1, keepdims=True)
    p2 = jnp.exp(e - m2)
    inv2 = pl.reciprocal(jnp.sum(p2, axis=1, keepdims=True))      # exact
    num1 = jnp.dot(p2.astype(s2.dtype), s2,
                   preferred_element_type=jnp.float32)            # (L1, D)
    o1_ref[0] = (num1 * inv2).astype(o1_ref.dtype)

    # softmax over L1 (torch dim=1) -> seq_2_hat.
    m1 = jnp.max(e, axis=0, keepdims=True)
    p1 = jnp.exp(e - m1)
    inv1 = pl.reciprocal(jnp.sum(p1, axis=0, keepdims=True))      # (1, L2) exact
    w1 = (p1 * inv1).astype(s1.dtype)                             # lane-aligned
    # seq_2_hat = w1^T @ s1 as a TN contraction (no explicit transpose).
    o2_ref[0] = lax.dot_general(w1, s1, (((0,), (0,)), ((), ())),
                                preferred_element_type=jnp.float32
                                ).astype(o2_ref.dtype)


def _local_inference_kernel_multi(s1_ref, s2_ref, o1_ref, o2_ref,
                                  m1_ref, l1_ref, acc2_ref,
                                  *, l1_total, tq, mxu_dtype):
    """General path: flash-style accumulation over L1 tiles. grid = (B, nq)."""
    q = pl.program_id(1)
    nq = pl.num_programs(1)

    s1 = s1_ref[0]                       # (tq, D)
    s2 = s2_ref[0]                       # (L2, D)
    if mxu_dtype is not None:
        s1 = s1.astype(mxu_dtype)
        s2 = s2.astype(mxu_dtype)

    e = lax.dot_general(s1, s2, (((1,), (1,)), ((), ())),
                        preferred_element_type=jnp.float32)      # (tq, L2) f32

    # ---- softmax over L2 (torch dim=2) -> seq_1_hat tile -------------------
    m2 = jnp.max(e, axis=1, keepdims=True)                        # (tq, 1)
    p2 = jnp.exp(e - m2)
    inv2 = pl.reciprocal(jnp.sum(p2, axis=1, keepdims=True))      # exact
    num1 = jnp.dot(p2.astype(s2.dtype), s2,
                   preferred_element_type=jnp.float32)            # (tq, D)
    o1_ref[0] = (num1 * inv2).astype(o1_ref.dtype)                # post-matmul norm

    # ---- softmax over L1 (torch dim=1), accumulated across L1 tiles --------
    @pl.when(q == 0)
    def _init():
        m1_ref[...] = jnp.full(m1_ref.shape, -jnp.inf, m1_ref.dtype)
        l1_ref[...] = jnp.zeros(l1_ref.shape, l1_ref.dtype)
        acc2_ref[...] = jnp.zeros(acc2_ref.shape, acc2_ref.dtype)

    # Mask rows past the true L1 (only needed when L1 % tq != 0).  Padded
    # seq_1 rows are also zeroed so garbage (NaN/Inf) cannot leak through the
    # p1^T @ s1 matmul (0 * NaN = NaN otherwise).
    if l1_total % tq != 0:
        row = q * tq + lax.broadcasted_iota(jnp.int32, (tq, 1), 0)
        valid = row < l1_total
        e_col = jnp.where(valid, e, -jnp.inf)
        s1_c = jnp.where(valid, s1, jnp.zeros_like(s1))
    else:
        e_col = e
        s1_c = s1

    m_prev = m1_ref[...]                                          # (1, L2)
    m_new = jnp.maximum(m_prev, jnp.max(e_col, axis=0, keepdims=True))
    alpha = jnp.exp(m_prev - m_new)                               # (1, L2)
    p1 = jnp.exp(e_col - m_new)                                   # (tq, L2)
    l1_ref[...] = alpha * l1_ref[...] + jnp.sum(p1, axis=0, keepdims=True)
    # contribution = p1^T @ s1 as a TN contraction (no explicit transpose).
    contrib = lax.dot_general(p1.astype(s1_c.dtype), s1_c,
                              (((0,), (0,)), ((), ())),
                              preferred_element_type=jnp.float32)  # (L2, D)
    acc2_ref[...] = alpha.T * acc2_ref[...] + contrib
    m1_ref[...] = m_new

    @pl.when(q == nq - 1)
    def _finalize():
        inv1 = pl.reciprocal(l1_ref[...])                          # exact, (1, L2)
        o2_ref[0] = (acc2_ref[...] * inv1.T).astype(o2_ref.dtype)


# --------------------------------------------------------------------------- #
# Sizing helpers
# --------------------------------------------------------------------------- #
def _vmem_capacity_bytes():
    try:
        info = pltpu.get_tpu_info()
        cap = getattr(info, "vmem_capacity_bytes", None)
        if cap:
            return int(cap)
    except Exception:
        pass
    return 64 * 1024 * 1024  # conservative (v7x-sized) fallback


def _vmem_estimate(tq, L2, D, itemsize, nq):
    """Working-set estimate: double-buffered I/O blocks, scratch, live temps."""
    lanes = max(((L2 + 127) // 128) * 128, 128)
    io_blocks = 2 * (2 * tq * D + 2 * L2 * D) * itemsize   # in + out, 2 buffers
    scratch = (L2 * D + 2 * lanes) * 4 if nq > 1 else 0    # f32 acc2 + m1 + l1
    temps = 6 * tq * lanes * 4                              # e, e_col, p2, p1, ...
    return io_blocks + scratch + temps


# --------------------------------------------------------------------------- #
# Wrapper
# --------------------------------------------------------------------------- #
def local_inference_layer(seq_1, seq_2, *, tq=None, mxu_dtype=None,
                          single_buffer_invariant=True, pad_features=True):
    """seq_1: (B, L1, D), seq_2: (B, L2, D) -> (seq_1_hat, seq_2_hat)."""
    B, L1, D = seq_1.shape
    B2, L2, D2 = seq_2.shape
    assert B == B2 and D == D2

    orig_D = D
    if pad_features and D % 128 != 0:
        # Zero-padding the feature dim is exact (e_ij unchanged; padded output
        # columns are zero and sliced off) and makes o1/o2 stores lane-dense.
        pad = (-D) % 128
        seq_1 = jnp.pad(seq_1, ((0, 0), (0, 0), (0, pad)))
        seq_2 = jnp.pad(seq_2, ((0, 0), (0, 0), (0, pad)))
        D = D + pad
    # TODO(synk): L2 could also be padded to a lane multiple, but that needs
    # -inf masking of the padded keys inside both softmaxes; left unpadded.

    itemsize = jnp.dtype(seq_1.dtype).itemsize
    capacity = _vmem_capacity_bytes()
    budget = int(0.6 * capacity)

    # L1 tile size: generation-aware default (512-class on 128-MiB v5e/v6e,
    # 256 on 64-MiB v7x), shrunk until the estimated working set fits.
    if tq is None:
        cap_tq = 512 if capacity >= (96 << 20) else 256
        tq = L1 if L1 <= cap_tq else cap_tq
        while tq > 8 and _vmem_estimate(tq, L2, D, itemsize,
                                        pl.cdiv(L1, tq)) > budget:
            nxt = max(8, ((tq // 2) // 8) * 8)
            if nxt == tq:
                break
            tq = nxt
    tq = min(tq, L1)
    assert tq == L1 or tq % 8 == 0, "tq must equal L1 or be a multiple of 8"
    nq = pl.cdiv(L1, tq)

    est = _vmem_estimate(tq, L2, D, itemsize, nq)
    vmem_limit = int(min(0.8 * capacity, max(1.3 * est, 32 * 1024 * 1024)))

    out_shape = (jax.ShapeDtypeStruct((B, L1, D), seq_1.dtype),
                 jax.ShapeDtypeStruct((B, L2, D), seq_2.dtype))

    if nq == 1:
        # Static fast path: no scratch, no init/finalize/rescale bookkeeping.
        kernel = functools.partial(_local_inference_kernel_single,
                                   mxu_dtype=mxu_dtype)
        grid_spec = pltpu.PrefetchScalarGridSpec(
            num_scalar_prefetch=0,
            grid=(B,),
            in_specs=[
                pl.BlockSpec((1, L1, D), lambda b: (b, 0, 0)),
                pl.BlockSpec((1, L2, D), lambda b: (b, 0, 0)),
            ],
            out_specs=[
                pl.BlockSpec((1, L1, D), lambda b: (b, 0, 0)),
                pl.BlockSpec((1, L2, D), lambda b: (b, 0, 0)),
            ],
            scratch_shapes=[],
        )
        s1_hat, s2_hat = pl.pallas_call(
            kernel,
            out_shape=out_shape,
            grid_spec=grid_spec,
            compiler_params=pltpu.CompilerParams(
                dimension_semantics=("parallel",),
                vmem_limit_bytes=vmem_limit,
            ),
        )(seq_1, seq_2)
    else:
        kernel = functools.partial(_local_inference_kernel_multi,
                                   l1_total=L1, tq=tq, mxu_dtype=mxu_dtype)

        def run(single_buf):
            # seq_2 / seq_2_hat blocks are constant in q: single-buffer them to
            # save 2*L2*D*itemsize of VMEM (double-buffering buys no overlap).
            inv_kwargs = ({"pipeline_mode": pl.Buffered(1)}
                          if single_buf else {})
            grid_spec = pltpu.PrefetchScalarGridSpec(
                num_scalar_prefetch=0,
                grid=(B, nq),
                in_specs=[
                    pl.BlockSpec((1, tq, D), lambda b, q: (b, q, 0)),
                    pl.BlockSpec((1, L2, D), lambda b, q: (b, 0, 0),
                                 **inv_kwargs),
                ],
                out_specs=[
                    pl.BlockSpec((1, tq, D), lambda b, q: (b, q, 0)),
                    pl.BlockSpec((1, L2, D), lambda b, q: (b, 0, 0),
                                 **inv_kwargs),
                ],
                scratch_shapes=[
                    pltpu.VMEM((1, L2), jnp.float32),    # running column max
                    pltpu.VMEM((1, L2), jnp.float32),    # running column denom
                    pltpu.VMEM((L2, D), jnp.float32),    # running seq_2_hat num
                ],
            )
            return pl.pallas_call(
                kernel,
                out_shape=out_shape,
                grid_spec=grid_spec,
                compiler_params=pltpu.CompilerParams(
                    dimension_semantics=("parallel", "arbitrary"),
                    vmem_limit_bytes=vmem_limit,
                ),
            )(seq_1, seq_2)

        if single_buffer_invariant and hasattr(pl, "Buffered"):
            try:
                s1_hat, s2_hat = run(True)
            except Exception:
                # Fall back to default double-buffering if this Pallas build
                # rejects Buffered(1) on these specs.
                s1_hat, s2_hat = run(False)
        else:
            s1_hat, s2_hat = run(False)

    if D != orig_D:
        s1_hat = s1_hat[..., :orig_D]
        s2_hat = s2_hat[..., :orig_D]
    return s1_hat, s2_hat


# --------------------------------------------------------------------------- #
# Reference + test
# --------------------------------------------------------------------------- #
def _reference(seq_1, seq_2):
    e = jnp.einsum("bld,bmd->blm", seq_1, seq_2)
    w2 = jax.nn.softmax(e, axis=2)
    w1 = jax.nn.softmax(e, axis=1)
    s1_hat = jnp.einsum("blm,bmd->bld", w2, seq_2)
    s2_hat = jnp.einsum("blm,bld->bmd", w1, seq_1)
    return s1_hat, s2_hat


if __name__ == "__main__":
    key = jax.random.PRNGKey(0)
    k1, k2 = jax.random.split(key)
    B, L1, L2, D = 2, 20, 8, 32
    seq_1 = jax.random.normal(k1, (B, L1, D), dtype=jnp.float32)
    seq_2 = jax.random.normal(k2, (B, L2, D), dtype=jnp.float32)

    r1, r2 = _reference(seq_1, seq_2)

    # Multi-tile path: tq=8 -> 3 L1 tiles (last one partial), exercises the
    # flash-style dim=1 accumulation and the remainder masking.
    s1_hat, s2_hat = local_inference_layer(seq_1, seq_2, tq=8)
    jax.block_until_ready((s1_hat, s2_hat))
    assert s1_hat.shape == (B, L1, D) and s2_hat.shape == (B, L2, D)
    assert jnp.allclose(s1_hat, r1, atol=2e-3, rtol=2e-3), \
        float(jnp.max(jnp.abs(s1_hat - r1)))
    assert jnp.allclose(s2_hat, r2, atol=2e-3, rtol=2e-3), \
        float(jnp.max(jnp.abs(s2_hat - r2)))

    # Default sizing: whole L1 in one tile -> single-tile fast path.
    f1, f2 = local_inference_layer(seq_1, seq_2)
    jax.block_until_ready((f1, f2))
    assert jnp.allclose(f1, r1, atol=2e-3, rtol=2e-3), \
        float(jnp.max(jnp.abs(f1 - r1)))
    assert jnp.allclose(f2, r2, atol=2e-3, rtol=2e-3), \
        float(jnp.max(jnp.abs(f2 - r2)))

    print("KERNEL_OK")
</pallas_src>

<mosaic_0001>
module attributes {stable_mosaic.version = 11 : i64} {
  func.func @_local_inference_kernel_multi(%arg0: i32, %arg1: i32, %arg2: memref<1x8x128xf32, #tpu.memory_space<vmem>>, %arg3: memref<1x8x128xf32, #tpu.memory_space<vmem>>, %arg4: memref<1x8x128xf32, #tpu.memory_space<vmem>>, %arg5: memref<1x8x128xf32, #tpu.memory_space<vmem>>, %arg6: memref<1x8xf32, #tpu.memory_space<vmem>>, %arg7: memref<1x8xf32, #tpu.memory_space<vmem>>, %arg8: memref<8x128xf32, #tpu.memory_space<vmem>>) attributes {dimension_semantics = [#tpu.dimension_semantics<parallel>, #tpu.dimension_semantics<arbitrary>], iteration_bounds = array<i64: 2, 3>, scalar_prefetch = 0 : i64, scratch_operands = 3 : i64, tpu.core_type = #tpu.core_type<tc>, window_params = [{transform_indices = @transform_0, window_bounds = array<i64: 1, 8, 128>}, {pipeline_mode = #tpu.pipeline_mode<synchronous>, transform_indices = @transform_1, window_bounds = array<i64: 1, 8, 128>}, {transform_indices = @transform_2, window_bounds = array<i64: 1, 8, 128>}, {pipeline_mode = #tpu.pipeline_mode<synchronous>, transform_indices = @transform_3, window_bounds = array<i64: 1, 8, 128>}]} {
    %c0 = arith.constant 0 : index
    %c0_0 = arith.constant 0 : index
    %c0_1 = arith.constant 0 : index
    %0 = vector.load %arg2[%c0, %c0_0, %c0_1] : memref<1x8x128xf32, #tpu.memory_space<vmem>>, vector<1x8x128xf32>
    %1 = vector.shape_cast %0 : vector<1x8x128xf32> to vector<8x128xf32>
    %c0_2 = arith.constant 0 : index
    %c0_3 = arith.constant 0 : index
    %c0_4 = arith.constant 0 : index
    %2 = vector.load %arg3[%c0_2, %c0_3, %c0_4] : memref<1x8x128xf32, #tpu.memory_space<vmem>>, vector<1x8x128xf32>
    %3 = vector.shape_cast %2 : vector<1x8x128xf32> to vector<8x128xf32>
    %cst = arith.constant dense<0.000000e+00> : vector<8x8xf32>
    %4 = tpu.matmul %1, %3, %cst {dimension_numbers = #tpu.dot_dimension_numbers<[1], [1], [0], [0], [0, 0, 1, 0], [], []>} : vector<8x128xf32>, vector<8x128xf32>, vector<8x8xf32> -> vector<8x8xf32>
    %cst_5 = arith.constant dense<0xFF800000> : vector<8xf32>
    %5 = vector.multi_reduction <maximumf>, %4, %cst_5 [1] : vector<8x8xf32> to vector<8xf32>
    %6 = vector.shape_cast %5 : vector<8xf32> to vector<8x1xf32>
    %7 = vector.broadcast %6 : vector<8x1xf32> to vector<8x8xf32>
    %8 = arith.subf %4, %7 : vector<8x8xf32>
    %9 = math.exp %8 : vector<8x8xf32>
    %cst_6 = arith.constant dense<0.000000e+00> : vector<8xf32>
    %10 = vector.multi_reduction <add>, %9, %cst_6 [1] : vector<8x8xf32> to vector<8xf32>
    %11 = vector.shape_cast %10 : vector<8xf32> to vector<8x1xf32>
    %12 = tpu.reciprocal %11 : vector<8x1xf32> -> vector<8x1xf32>
    %cst_7 = arith.constant dense<0.000000e+00> : vector<8x128xf32>
    %13 = tpu.matmul %9, %3, %cst_7 {dimension_numbers = #tpu.dot_dimension_numbers<[1], [0], [0], [1], [0, 0, 1, 1], [], []>} : vector<8x8xf32>, vector<8x128xf32>, vector<8x128xf32> -> vector<8x128xf32>
    %14 = vector.broadcast %12 : vector<8x1xf32> to vector<8x128xf32>
    %15 = arith.mulf %13, %14 : vector<8x128xf32>
    %c0_8 = arith.constant 0 : index
    %c0_9 = arith.constant 0 : index
    %c0_10 = arith.constant 0 : index
    %16 = vector.load %arg4[%c0_8, %c0_9, %c0_10] : memref<1x8x128xf32, #tpu.memory_space<vmem>>, vector<1x8x128xf32>
    %17 = vector.shape_cast %16 : vector<1x8x128xf32> to vector<8x128xf32>
    %18 = vector.shape_cast %15 : vector<8x128xf32> to vector<1x8x128xf32>
    tpu.vector_store %arg4[%c0_8, %c0_9, %c0_10], %18 {strides = array<i32>} : memref<1x8x128xf32, #tpu.memory_space<vmem>>, vector<1x8x128xf32>,
    %c0_i32 = arith.constant 0 : i32
    %19 = arith.cmpi eq, %arg1, %c0_i32 : i32
    %20 = arith.extui %19 : i1 to i32
    %c0_i32_11 = arith.constant 0 : i32
    %21 = arith.cmpi ne, %20, %c0_i32_11 : i32
    scf.if %21 {
      %cst_30 = arith.constant 0xFF800000 : f32
      %62 = vector.broadcast %cst_30 : f32 to vector<1x8xf32>
      %c0_31 = arith.constant 0 : index
      %c0_32 = arith.constant 0 : index
      %63 = vector.load %arg6[%c0_31, %c0_32] : memref<1x8xf32, #tpu.memory_space<vmem>>, vector<1x8xf32>
      tpu.vector_store %arg6[%c0_31, %c0_32], %62 {strides = array<i32>} : memref<1x8xf32, #tpu.memory_space<vmem>>, vector<1x8xf32>,
      %cst_33 = arith.constant 0.000000e+00 : f32
      %64 = vector.broadcast %cst_33 : f32 to vector<1x8xf32>
      %c0_34 = arith.constant 0 : index
      %c0_35 = arith.constant 0 : index
      %65 = vector.load %arg7[%c0_34, %c0_35] : memref<1x8xf32, #tpu.memory_space<vmem>>, vector<1x8xf32>
      tpu.vector_store %arg7[%c0_34, %c0_35], %64 {strides = array<i32>} : memref<1x8xf32, #tpu.memory_space<vmem>>, vector<1x8xf32>,
      %cst_36 = arith.constant 0.000000e+00 : f32
      %66 = vector.broadcast %cst_36 : f32 to vector<8x128xf32>
      %c0_37 = arith.constant 0 : index
      %c0_38 = arith.constant 0 : index
      %67 = vector.load %arg8[%c0_37, %c0_38] : memref<8x128xf32, #tpu.memory_space<vmem>>, vector<8x128xf32>
      tpu.vector_store %arg8[%c0_37, %c0_38], %66 {strides = array<i32>} : memref<8x128xf32, #tpu.memory_space<vmem>>, vector<8x128xf32>,
    } else {
    }
    %c8_i32 = arith.constant 8 : i32
    %22 = arith.muli %arg1, %c8_i32 : i32
    %23 = tpu.iota {dimensions = array<i32: 0>} : vector<8x1xi32>
    %24 = vector.broadcast %22 : i32 to vector<8x1xi32>
    %25 = arith.addi %24, %23 : vector<8x1xi32>
    %c20_i32 = arith.constant 20 : i32
    %26 = vector.broadcast %c20_i32 : i32 to vector<8x1xi32>
    %27 = arith.cmpi slt, %25, %26 : vector<8x1xi32>
    %cst_12 = arith.constant 0xFF800000 : f32
    %28 = vector.shape_cast %27 : vector<8x1xi1> to vector<8x1xi1>
    %29 = vector.broadcast %28 : vector<8x1xi1> to vector<8x8xi1>
    %30 = vector.broadcast %cst_12 : f32 to vector<8x8xf32>
    %31 = arith.select %29, %4, %30 : vector<8x8xi1>, vector<8x8xf32>
    %cst_13 = arith.constant 0.000000e+00 : f32
    %32 = vector.broadcast %cst_13 : f32 to vector<8x128xf32>
    %33 = vector.shape_cast %27 : vector<8x1xi1> to vector<8x1xi1>
    %34 = vector.broadcast %33 : vector<8x1xi1> to vector<8x128xi1>
    %35 = arith.select %34, %1, %32 : vector<8x128xi1>, vector<8x128xf32>
    %c0_14 = arith.constant 0 : index
    %c0_15 = arith.constant 0 : index
    %36 = vector.load %arg6[%c0_14, %c0_15] : memref<1x8xf32, #tpu.memory_space<vmem>>, vector<1x8xf32>
    %cst_16 = arith.constant dense<0xFF800000> : vector<8xf32>
    %37 = vector.multi_reduction <maximumf>, %31, %cst_16 [0] : vector<8x8xf32> to vector<8xf32>
    %38 = vector.shape_cast %37 : vector<8xf32> to vector<1x8xf32>
    %39 = arith.maximumf %36, %38 : vector<1x8xf32>
    %40 = arith.subf %36, %39 : vector<1x8xf32>
    %41 = math.exp %40 : vector<1x8xf32>
    %42 = vector.broadcast %39 : vector<1x8xf32> to vector<8x8xf32>
    %43 = arith.subf %31, %42 : vector<8x8xf32>
    %44 = math.exp %43 : vector<8x8xf32>
    %c0_17 = arith.constant 0 : index
    %c0_18 = arith.constant 0 : index
    %45 = vector.load %arg7[%c0_17, %c0_18] : memref<1x8xf32, #tpu.memory_space<vmem>>, vector<1x8xf32>
    %46 = arith.mulf %41, %45 : vector<1x8xf32>
    %cst_19 = arith.constant dense<0.000000e+00> : vector<8xf32>
    %47 = vector.multi_reduction <add>, %44, %cst_19 [0] : vector<8x8xf32> to vector<8xf32>
    %48 = vector.shape_cast %47 : vector<8xf32> to vector<1x8xf32>
    %49 = arith.addf %46, %48 : vector<1x8xf32>
    %c0_20 = arith.constant 0 : index
    %c0_21 = arith.constant 0 : index
    %50 = vector.load %arg7[%c0_20, %c0_21] : memref<1x8xf32, #tpu.memory_space<vmem>>, vector<1x8xf32>
    tpu.vector_store %arg7[%c0_20, %c0_21], %49 {strides = array<i32>} : memref<1x8xf32, #tpu.memory_space<vmem>>, vector<1x8xf32>,
    %cst_22 = arith.constant dense<0.000000e+00> : vector<8x128xf32>
    %51 = tpu.matmul %44, %35, %cst_22 {dimension_numbers = #tpu.dot_dimension_numbers<[0], [0], [1], [1], [0, 1, 1, 1], [], []>} : vector<8x8xf32>, vector<8x128xf32>, vector<8x128xf32> -> vector<8x128xf32>
    %52 = tpu.transpose %41, [1, 0] : vector<1x8xf32> -> vector<8x1xf32>
    %c0_23 = arith.constant 0 : index
    %c0_24 = arith.constant 0 : index
    %53 = vector.load %arg8[%c0_23, %c0_24] : memref<8x128xf32, #tpu.memory_space<vmem>>, vector<8x128xf32>
    %54 = vector.broadcast %52 : vector<8x1xf32> to vector<8x128xf32>
    %55 = arith.mulf %54, %53 : vector<8x128xf32>
    %56 = arith.addf %55, %51 : vector<8x128xf32>
    %c0_25 = arith.constant 0 : index
    %c0_26 = arith.constant 0 : index
    %57 = vector.load %arg8[%c0_25, %c0_26] : memref<8x128xf32, #tpu.memory_space<vmem>>, vector<8x128xf32>
    tpu.vector_store %arg8[%c0_25, %c0_26], %56 {strides = array<i32>} : memref<8x128xf32, #tpu.memory_space<vmem>>, vector<8x128xf32>,
    %c0_27 = arith.constant 0 : index
    %c0_28 = arith.constant 0 : index
    %58 = vector.load %arg6[%c0_27, %c0_28] : memref<1x8xf32, #tpu.memory_space<vmem>>, vector<1x8xf32>
    tpu.vector_store %arg6[%c0_27, %c0_28], %39 {strides = array<i32>} : memref<1x8xf32, #tpu.memory_space<vmem>>, vector<1x8xf32>,
    %c2_i32 = arith.constant 2 : i32
    %59 = arith.cmpi eq, %arg1, %c2_i32 : i32
    %60 = arith.extui %59 : i1 to i32
    %c0_i32_29 = arith.constant 0 : i32
    %61 = arith.cmpi ne, %60, %c0_i32_29 : i32
    scf.if %61 {
      %c0_30 = arith.constant 0 : index
      %c0_31 = arith.constant 0 : index
      %62 = vector.load %arg7[%c0_30, %c0_31] : memref<1x8xf32, #tpu.memory_space<vmem>>, vector<1x8xf32>
      %63 = tpu.reciprocal %62 : vector<1x8xf32> -> vector<1x8xf32>
      %c0_32 = arith.constant 0 : index
      %c0_33 = arith.constant 0 : index
      %64 = vector.load %arg8[%c0_32, %c0_33] : memref<8x128xf32, #tpu.memory_space<vmem>>, vector<8x128xf32>
      %65 = tpu.transpose %63, [1, 0] : vector<1x8xf32> -> vector<8x1xf32>
      %66 = vector.broadcast %65 : vector<8x1xf32> to vector<8x128xf32>
      %67 = arith.mulf %64, %66 : vector<8x128xf32>
      %c0_34 = arith.constant 0 : index
      %c0_35 = arith.constant 0 : index
      %c0_36 = arith.constant 0 : index
      %68 = vector.load %arg5[%c0_34, %c0_35, %c0_36] : memref<1x8x128xf32, #tpu.memory_space<vmem>>, vector<1x8x128xf32>
      %69 = vector.shape_cast %68 : vector<1x8x128xf32> to vector<8x128xf32>
      %70 = vector.shape_cast %67 : vector<8x128xf32> to vector<1x8x128xf32>
      tpu.vector_store %arg5[%c0_34, %c0_35, %c0_36], %70 {strides = array<i32>} : memref<1x8x128xf32, #tpu.memory_space<vmem>>, vector<1x8x128xf32>,
    } else {
    }
    return
  }
  func.func @transform_0(%arg0: i32, %arg1: i32) -> (i32, i32, i32) {
    %c0_i32 = arith.constant 0 : i32
    %c0_i32_0 = arith.constant 0 : i32
    return %arg0, %arg1, %c0_i32 : i32, i32, i32
  }
  func.func @transform_1(%arg0: i32, %arg1: i32) -> (i32, i32, i32) {
    %c0_i32 = arith.constant 0 : i32
    %c0_i32_0 = arith.constant 0 : i32
    %c0_i32_1 = arith.constant 0 : i32
    return %arg0, %c0_i32, %c0_i32_0 : i32, i32, i32
  }
  func.func @transform_2(%arg0: i32, %arg1: i32) -> (i32, i32, i32) {
    %c0_i32 = arith.constant 0 : i32
    %c0_i32_0 = arith.constant 0 : i32
    return %arg0, %arg1, %c0_i32 : i32, i32, i32
  }
  func.func @transform_3(%arg0: i32, %arg1: i32) -> (i32, i32, i32) {
    %c0_i32 = arith.constant 0 : i32
    %c0_i32_0 = arith.constant 0 : i32
    %c0_i32_1 = arith.constant 0 : i32
    return %arg0, %c0_i32, %c0_i32_0 : i32, i32, i32
  }
}

module attributes {stable_mosaic.version = 11 : i64} {
  func.func @_local_inference_kernel_multi(%arg0: i32, %arg1: i32, %arg2: memref<1x8x128xf32, #tpu.memory_space<vmem>>, %arg3: memref<1x8x128xf32, #tpu.memory_space<vmem>>, %arg4: memref<1x8x128xf32, #tpu.memory_space<vmem>>, %arg5: memref<1x8x128xf32, #tpu.memory_space<vmem>>, %arg6: memref<1x8xf32, #tpu.memory_space<vmem>>, %arg7: memref<1x8xf32, #tpu.memory_space<vmem>>, %arg8: memref<8x128xf32, #tpu.memory_space<vmem>>) attributes {dimension_semantics = [#tpu.dimension_semantics<parallel>, #tpu.dimension_semantics<arbitrary>], iteration_bounds = array<i64: 2, 3>, scalar_prefetch = 0 : i64, scratch_operands = 3 : i64, tpu.core_type = #tpu.core_type<tc>, window_params = [{transform_indices = @transform_0, window_bounds = array<i64: 1, 8, 128>}, {transform_indices = @transform_1, window_bounds = array<i64: 1, 8, 128>}, {transform_indices = @transform_2, window_bounds = array<i64: 1, 8, 128>}, {transform_indices = @transform_3, window_bounds = array<i64: 1, 8, 128>}]} {
    %c0 = arith.constant 0 : index
    %c0_0 = arith.constant 0 : index
    %c0_1 = arith.constant 0 : index
    %0 = vector.load %arg2[%c0, %c0_0, %c0_1] : memref<1x8x128xf32, #tpu.memory_space<vmem>>, vector<1x8x128xf32>
    %1 = vector.shape_cast %0 : vector<1x8x128xf32> to vector<8x128xf32>
    %c0_2 = arith.constant 0 : index
    %c0_3 = arith.constant 0 : index
    %c0_4 = arith.constant 0 : index
    %2 = vector.load %arg3[%c0_2, %c0_3, %c0_4] : memref<1x8x128xf32, #tpu.memory_space<vmem>>, vector<1x8x128xf32>
    %3 = vector.shape_cast %2 : vector<1x8x128xf32> to vector<8x128xf32>
    %cst = arith.constant dense<0.000000e+00> : vector<8x8xf32>
    %4 = tpu.matmul %1, %3, %cst {dimension_numbers = #tpu.dot_dimension_numbers<[1], [1], [0], [0], [0, 0, 1, 0], [], []>} : vector<8x128xf32>, vector<8x128xf32>, vector<8x8xf32> -> vector<8x8xf32>
    %cst_5 = arith.constant dense<0xFF800000> : vector<8xf32>
    %5 = vector.multi_reduction <maximumf>, %4, %cst_5 [1] : vector<8x8xf32> to vector<8xf32>
    %6 = vector.shape_cast %5 : vector<8xf32> to vector<8x1xf32>
    %7 = vector.broadcast %6 : vector<8x1xf32> to vector<8x8xf32>
    %8 = arith.subf %4, %7 : vector<8x8xf32>
    %9 = math.exp %8 : vector<8x8xf32>
    %cst_6 = arith.constant dense<0.000000e+00> : vector<8xf32>
    %10 = vector.multi_reduction <add>, %9, %cst_6 [1] : vector<8x8xf32> to vector<8xf32>
    %11 = vector.shape_cast %10 : vector<8xf32> to vector<8x1xf32>
    %12 = tpu.reciprocal %11 : vector<8x1xf32> -> vector<8x1xf32>
    %cst_7 = arith.constant dense<0.000000e+00> : vector<8x128xf32>
    %13 = tpu.matmul %9, %3, %cst_7 {dimension_numbers = #tpu.dot_dimension_numbers<[1], [0], [0], [1], [0, 0, 1, 1], [], []>} : vector<8x8xf32>, vector<8x128xf32>, vector<8x128xf32> -> vector<8x128xf32>
    %14 = vector.broadcast %12 : vector<8x1xf32> to vector<8x128xf32>
    %15 = arith.mulf %13, %14 : vector<8x128xf32>
    %c0_8 = arith.constant 0 : index
    %c0_9 = arith.constant 0 : index
    %c0_10 = arith.constant 0 : index
    %16 = vector.load %arg4[%c0_8, %c0_9, %c0_10] : memref<1x8x128xf32, #tpu.memory_space<vmem>>, vector<1x8x128xf32>
    %17 = vector.shape_cast %16 : vector<1x8x128xf32> to vector<8x128xf32>
    %18 = vector.shape_cast %15 : vector<8x128xf32> to vector<1x8x128xf32>
    tpu.vector_store %arg4[%c0_8, %c0_9, %c0_10], %18 {strides = array<i32>} : memref<1x8x128xf32, #tpu.memory_space<vmem>>, vector<1x8x128xf32>,
    %c0_i32 = arith.constant 0 : i32
    %19 = arith.cmpi eq, %arg1, %c0_i32 : i32
    %20 = arith.extui %19 : i1 to i32
    %c0_i32_11 = arith.constant 0 : i32
    %21 = arith.cmpi ne, %20, %c0_i32_11 : i32
    scf.if %21 {
      %cst_30 = arith.constant 0xFF800000 : f32
      %62 = vector.broadcast %cst_30 : f32 to vector<1x8xf32>
      %c0_31 = arith.constant 0 : index
      %c0_32 = arith.constant 0 : index
      %63 = vector.load %arg6[%c0_31, %c0_32] : memref<1x8xf32, #tpu.memory_space<vmem>>, vector<1x8xf32>
      tpu.vector_store %arg6[%c0_31, %c0_32], %62 {strides = array<i32>} : memref<1x8xf32, #tpu.memory_space<vmem>>, vector<1x8xf32>,
      %cst_33 = arith.constant 0.000000e+00 : f32
      %64 = vector.broadcast %cst_33 : f32 to vector<1x8xf32>
      %c0_34 = arith.constant 0 : index
      %c0_35 = arith.constant 0 : index
      %65 = vector.load %arg7[%c0_34, %c0_35] : memref<1x8xf32, #tpu.memory_space<vmem>>, vector<1x8xf32>
      tpu.vector_store %arg7[%c0_34, %c0_35], %64 {strides = array<i32>} : memref<1x8xf32, #tpu.memory_space<vmem>>, vector<1x8xf32>,
      %cst_36 = arith.constant 0.000000e+00 : f32
      %66 = vector.broadcast %cst_36 : f32 to vector<8x128xf32>
      %c0_37 = arith.constant 0 : index
      %c0_38 = arith.constant 0 : index
      %67 = vector.load %arg8[%c0_37, %c0_38] : memref<8x128xf32, #tpu.memory_space<vmem>>, vector<8x128xf32>
      tpu.vector_store %arg8[%c0_37, %c0_38], %66 {strides = array<i32>} : memref<8x128xf32, #tpu.memory_space<vmem>>, vector<8x128xf32>,
    } else {
    }
    %c8_i32 = arith.constant 8 : i32
    %22 = arith.muli %arg1, %c8_i32 : i32
    %23 = tpu.iota {dimensions = array<i32: 0>} : vector<8x1xi32>
    %24 = vector.broadcast %22 : i32 to vector<8x1xi32>
    %25 = arith.addi %24, %23 : vector<8x1xi32>
    %c20_i32 = arith.constant 20 : i32
    %26 = vector.broadcast %c20_i32 : i32 to vector<8x1xi32>
    %27 = arith.cmpi slt, %25, %26 : vector<8x1xi32>
    %cst_12 = arith.constant 0xFF800000 : f32
    %28 = vector.shape_cast %27 : vector<8x1xi1> to vector<8x1xi1>
    %29 = vector.broadcast %28 : vector<8x1xi1> to vector<8x8xi1>
    %30 = vector.broadcast %cst_12 : f32 to vector<8x8xf32>
    %31 = arith.select %29, %4, %30 : vector<8x8xi1>, vector<8x8xf32>
    %cst_13 = arith.constant 0.000000e+00 : f32
    %32 = vector.broadcast %cst_13 : f32 to vector<8x128xf32>
    %33 = vector.shape_cast %27 : vector<8x1xi1> to vector<8x1xi1>
    %34 = vector.broadcast %33 : vector<8x1xi1> to vector<8x128xi1>
    %35 = arith.select %34, %1, %32 : vector<8x128xi1>, vector<8x128xf32>
    %c0_14 = arith.constant 0 : index
    %c0_15 = arith.constant 0 : index
    %36 = vector.load %arg6[%c0_14, %c0_15] : memref<1x8xf32, #tpu.memory_space<vmem>>, vector<1x8xf32>
    %cst_16 = arith.constant dense<0xFF800000> : vector<8xf32>
    %37 = vector.multi_reduction <maximumf>, %31, %cst_16 [0] : vector<8x8xf32> to vector<8xf32>
    %38 = vector.shape_cast %37 : vector<8xf32> to vector<1x8xf32>
    %39 = arith.maximumf %36, %38 : vector<1x8xf32>
    %40 = arith.subf %36, %39 : vector<1x8xf32>
    %41 = math.exp %40 : vector<1x8xf32>
    %42 = vector.broadcast %39 : vector<1x8xf32> to vector<8x8xf32>
    %43 = arith.subf %31, %42 : vector<8x8xf32>
    %44 = math.exp %43 : vector<8x8xf32>
    %c0_17 = arith.constant 0 : index
    %c0_18 = arith.constant 0 : index
    %45 = vector.load %arg7[%c0_17, %c0_18] : memref<1x8xf32, #tpu.memory_space<vmem>>, vector<1x8xf32>
    %46 = arith.mulf %41, %45 : vector<1x8xf32>
    %cst_19 = arith.constant dense<0.000000e+00> : vector<8xf32>
    %47 = vector.multi_reduction <add>, %44, %cst_19 [0] : vector<8x8xf32> to vector<8xf32>
    %48 = vector.shape_cast %47 : vector<8xf32> to vector<1x8xf32>
    %49 = arith.addf %46, %48 : vector<1x8xf32>
    %c0_20 = arith.constant 0 : index
    %c0_21 = arith.constant 0 : index
    %50 = vector.load %arg7[%c0_20, %c0_21] : memref<1x8xf32, #tpu.memory_space<vmem>>, vector<1x8xf32>
    tpu.vector_store %arg7[%c0_20, %c0_21], %49 {strides = array<i32>} : memref<1x8xf32, #tpu.memory_space<vmem>>, vector<1x8xf32>,
    %cst_22 = arith.constant dense<0.000000e+00> : vector<8x128xf32>
    %51 = tpu.matmul %44, %35, %cst_22 {dimension_numbers = #tpu.dot_dimension_numbers<[0], [0], [1], [1], [0, 1, 1, 1], [], []>} : vector<8x8xf32>, vector<8x128xf32>, vector<8x128xf32> -> vector<8x128xf32>
    %52 = tpu.transpose %41, [1, 0] : vector<1x8xf32> -> vector<8x1xf32>
    %c0_23 = arith.constant 0 : index
    %c0_24 = arith.constant 0 : index
    %53 = vector.load %arg8[%c0_23, %c0_24] : memref<8x128xf32, #tpu.memory_space<vmem>>, vector<8x128xf32>
    %54 = vector.broadcast %52 : vector<8x1xf32> to vector<8x128xf32>
    %55 = arith.mulf %54, %53 : vector<8x128xf32>
    %56 = arith.addf %55, %51 : vector<8x128xf32>
    %c0_25 = arith.constant 0 : index
    %c0_26 = arith.constant 0 : index
    %57 = vector.load %arg8[%c0_25, %c0_26] : memref<8x128xf32, #tpu.memory_space<vmem>>, vector<8x128xf32>
    tpu.vector_store %arg8[%c0_25, %c0_26], %56 {strides = array<i32>} : memref<8x128xf32, #tpu.memory_space<vmem>>, vector<8x128xf32>,
    %c0_27 = arith.constant 0 : index
    %c0_28 = arith.constant 0 : index
    %58 = vector.load %arg6[%c0_27, %c0_28] : memref<1x8xf32, #tpu.memory_space<vmem>>, vector<1x8xf32>
    tpu.vector_store %arg6[%c0_27, %c0_28], %39 {strides = array<i32>} : memref<1x8xf32, #tpu.memory_space<vmem>>, vector<1x8xf32>,
    %c2_i32 = arith.constant 2 : i32
    %59 = arith.cmpi eq, %arg1, %c2_i32 : i32
    %60 = arith.extui %59 : i1 to i32
    %c0_i32_29 = arith.constant 0 : i32
    %61 = arith.cmpi ne, %60, %c0_i32_29 : i32
    scf.if %61 {
      %c0_30 = arith.constant 0 : index
      %c0_31 = arith.constant 0 : index
      %62 = vector.load %arg7[%c0_30, %c0_31] : memref<1x8xf32, #tpu.memory_space<vmem>>, vector<1x8xf32>
      %63 = tpu.reciprocal %62 : vector<1x8xf32> -> vector<1x8xf32>
      %c0_32 = arith.constant 0 : index
      %c0_33 = arith.constant 0 : index
      %64 = vector.load %arg8[%c0_32, %c0_33] : memref<8x128xf32, #tpu.memory_space<vmem>>, vector<8x128xf32>
      %65 = tpu.transpose %63, [1, 0] : vector<1x8xf32> -> vector<8x1xf32>
      %66 = vector.broadcast %65 : vector<8x1xf32> to vector<8x128xf32>
      %67 = arith.mulf %64, %66 : vector<8x128xf32>
      %c0_34 = arith.constant 0 : index
      %c0_35 = arith.constant 0 : index
      %c0_36 = arith.constant 0 : index
      %68 = vector.load %arg5[%c0_34, %c0_35, %c0_36] : memref<1x8x128xf32, #tpu.memory_space<vmem>>, vector<1x8x128xf32>
      %69 = vector.shape_cast %68 : vector<1x8x128xf32> to vector<8x128xf32>
      %70 = vector.shape_cast %67 : vector<8x128xf32> to vector<1x8x128xf32>
      tpu.vector_store %arg5[%c0_34, %c0_35, %c0_36], %70 {strides = array<i32>} : memref<1x8x128xf32, #tpu.memory_space<vmem>>, vector<1x8x128xf32>,
    } else {
    }
    return
  }
  func.func @transform_0(%arg0: i32, %arg1: i32) -> (i32, i32, i32) {
    %c0_i32 = arith.constant 0 : i32
    %c0_i32_0 = arith.constant 0 : i32
    return %arg0, %arg1, %c0_i32 : i32, i32, i32
  }
  func.func @transform_1(%arg0: i32, %arg1: i32) -> (i32, i32, i32) {
    %c0_i32 = arith.constant 0 : i32
    %c0_i32_0 = arith.constant 0 : i32
    %c0_i32_1 = arith.constant 0 : i32
    return %arg0, %c0_i32, %c0_i32_0 : i32, i32, i32
  }
  func.func @transform_2(%arg0: i32, %arg1: i32) -> (i32, i32, i32) {
    %c0_i32 = arith.constant 0 : i32
    %c0_i32_0 = arith.constant 0 : i32
    return %arg0, %arg1, %c0_i32 : i32, i32, i32
  }
  func.func @transform_3(%arg0: i32, %arg1: i32) -> (i32, i32, i32) {
    %c0_i32 = arith.constant 0 : i32
    %c0_i32_0 = arith.constant 0 : i32
    %c0_i32_1 = arith.constant 0 : i32
    return %arg0, %c0_i32, %c0_i32_0 : i32, i32, i32
  }
}

</mosaic_0001>

<llo_original>
// kernel: tpu_custom_call.1
$region0: #{tpu_custom_call.1}
  #allocation0 [shape = 'u32[]', space=smem, size = 0x4, offset = 0x4, fixed_abs, tag = 'smem constant byte address 0x4 - core index']
  #allocation1 [shape = 'u32[144,128]{1,0:T(1,128)}', space=vmem, size = 0x12000, scoped, tag = 'internal scratch']
  #allocation2 [shape = 'f32[1,8]{1,0:T(1,128)}', space=vmem, size = 0x200, scoped, tag = 'scratch operand']
  #allocation3 [shape = 'f32[1,8]{1,0:T(1,128)}', space=vmem, size = 0x200, scoped, tag = 'scratch operand']
  #allocation4 [shape = 'f32[8,128]{1,0:T(8,128)}', space=vmem, size = 0x1000, scoped, tag = 'scratch operand']
  %s0 = inlined_call_operand.vmem [shape: f32[2,20,128], index: 0, kind: input, shape index: {}]
  %s1 = inlined_call_operand.vmem [shape: f32[2,8,128], index: 1, kind: input, shape index: {}]
  %s2 = inlined_call_operand.vmem [shape: f32[2,20,128], index: 2, kind: output, shape index: {0}]
  %s3 = inlined_call_operand.hbm [shape: f32[2,8,128], index: 3, kind: output, shape index: {1}]
  %4 = xla_tuple %s2, %s3
  %s5 = sld [smem:[#allocation0]]
  $region57: #{tpu_custom_call.1} parent=0
    _
  %s7 = ssub.s32 1, %s5
  %s8 = scalar_select 0, %s7, %s5
  $region1: #{tpu_custom_call.1} parent=0
    #allocation5 [shape = 'u8[4096]{0}', space=vmem, size = 0x1000, scoped, tag = 'output window, operand 1, single buffered']
    #allocation6 [shape = 's32[2]{0}', space=sflag, size = 0x8, scoped, tag = 'scoped memory for tpu_custom_call.1']
    %9 = vsyncpa [#allocation6], 0
    loop: start=0, step=1, limit=8
    $region2: #{tpu_custom_call.1} parent=1 // loop_pre_header
      _
    $region3: #{tpu_custom_call.1} parent=1 // loop_header
      %s11 = sphi 0, %s15
      %p12 = scmp.ge.s32.totalorder %s11, 8
      %s18 = sphi 0, %s30
      %s19 = sphi 0, %s26
      %s20 = sphi 0, %s18
      %s21 = sphi 0, %s19
      %s22 = sphi 0, %s20
      %s23 = sphi 0, %s21
      %s35 = sphi 0, %s37
      %s38 = sphi 0, %s35
      %s39 = sphi 0, %s38
      %s55 = sphi 0, %s39
      %s61 = sphi 0, %s63
      %s64 = sphi 0, %s61
      %s65 = sphi 0, %s64
      %s81 = sphi 0, %s65
      %s89 = sphi 0, %s91
      %s92 = sphi 0, %s89
      %s93 = sphi 0, %s92
      %s109 = sphi 0, %s93
      %s115 = sphi 0, %s117
      %s118 = sphi 0, %s115
      %s119 = sphi 0, %s118
      %s135 = sphi 0, %s119
    $region4: #{tpu_custom_call.1} parent=1 // loop_header_branch
      %14 = sbr.rel (%p12) target = $region8
    $region5: #{tpu_custom_call.1} parent=1 // loop_body
      %s16 = ssub.s32 %s11, 1
      %s17 = ssub.s32 %s11, 2
      %s24 = sadd.s32 1, %s19
      %p25 = scmp.ge.s32.totalorder %s24, 3
      %s26 = scalar_select %p25, 0, %s24
      %s27 = sadd.s32 1, %s18
      %s28 = scalar_select %p25, %s27, %s18
      %p29 = scmp.ge.s32.totalorder %s28, 2
      %s30 = scalar_select %p29, 0, %s28
      %s31 = ssub.s32 %s18, %s30
      %s32 = ssub.s32 %s19, %s26
      %s33 = sor.u32 %s31, %s32
      %p34 = scmp.eq.s32.totalorder %s33, 0
      %s36 = sadd.s32 %s35, 1
      %s37 = scalar_select %p34, %s35, %s36
      %p40 = pneg %p34
      %p41 = scmp.eq.s32.totalorder %s11, 5
      %p42 = por %p40, %p41
      %p43 = scmp.ne.s32.totalorder %s35, %s38
      %p44 = scmp.eq.s32.totalorder %s11, 0
      %p45 = por %p43, %p44
      %p46 = scmp.ne.s32.totalorder %s35, %s38
      %p47 = scmp.eq.s32.totalorder %s16, 5
      %p48 = por %p46, %p47
      %p49 = scmp.ne.s32.totalorder %s38, %s39
      %p50 = scmp.eq.s32.totalorder %s16, 0
      %p51 = por %p49, %p50
      %p52 = scmp.ne.s32.totalorder %s38, %s39
      %p53 = scmp.eq.s32.totalorder %s17, 5
      %p54 = por %p52, %p53
      %p56 = scmp.ne.s32.totalorder %s39, %s55
      %p57 = scmp.eq.s32.totalorder %s17, 0
      %p58 = por %p56, %p57
      %s59 = ssub.s32 %s18, %s30
      %p60 = scmp.eq.s32.totalorder %s59, 0
      %s62 = sadd.s32 %s61, 1
      %s63 = scalar_select %p60, %s61, %s62
      %p66 = pneg %p60
      %p67 = scmp.eq.s32.totalorder %s11, 5
      %p68 = por %p66, %p67
      %p69 = scmp.ne.s32.totalorder %s61, %s64
      %p70 = scmp.eq.s32.totalorder %s11, 0
      %p71 = por %p69, %p70
      %p72 = scmp.ne.s32.totalorder %s61, %s64
      %p73 = scmp.eq.s32.totalorder %s16, 5
      %p74 = por %p72, %p73
      %p75 = scmp.ne.s32.totalorder %s64, %s65
      %p76 = scmp.eq.s32.totalorder %s16, 0
      %p77 = por %p75, %p76
      %p78 = scmp.ne.s32.totalorder %s64, %s65
      %p79 = scmp.eq.s32.totalorder %s17, 5
      %p80 = por %p78, %p79
      %p82 = scmp.ne.s32.totalorder %s65, %s81
      %p83 = scmp.eq.s32.totalorder %s17, 0
      %p84 = por %p82, %p83
      %s85 = ssub.s32 %s18, %s30
      %s86 = ssub.s32 %s19, %s26
      %s87 = sor.u32 %s85, %s86
      %p88 = scmp.eq.s32.totalorder %s87, 0
      %s90 = sadd.s32 %s89, 1
      %s91 = scalar_select %p88, %s89, %s90
      %p94 = pneg %p88
      %p95 = scmp.eq.s32.totalorder %s11, 5
      %p96 = por %p94, %p95
      %p97 = scmp.ne.s32.totalorder %s89, %s92
      %p98 = scmp.eq.s32.totalorder %s11, 0
      %p99 = por %p97, %p98
      %p100 = scmp.ne.s32.totalorder %s89, %s92
      %p101 = scmp.eq.s32.totalorder %s16, 5
      %p102 = por %p100, %p101
      %p103 = scmp.ne.s32.totalorder %s92, %s93
      %p104 = scmp.eq.s32.totalorder %s16, 0
      %p105 = por %p103, %p104
      %p106 = scmp.ne.s32.totalorder %s92, %s93
      %p107 = scmp.eq.s32.totalorder %s17, 5
      %p108 = por %p106, %p107
      %p110 = scmp.ne.s32.totalorder %s93, %s109
      %p111 = scmp.eq.s32.totalorder %s17, 0
      %p112 = por %p110, %p111
      %s113 = ssub.s32 %s18, %s30
      %p114 = scmp.eq.s32.totalorder %s113, 0
      %s116 = sadd.s32 %s115, 1
      %s117 = scalar_select %p114, %s115, %s116
      %p120 = pneg %p114
      %p121 = scmp.eq.s32.totalorder %s11, 5
      %p122 = por %p120, %p121
      %p123 = scmp.ne.s32.totalorder %s115, %s118
      %p124 = scmp.eq.s32.totalorder %s11, 0
      %p125 = por %p123, %p124
      %p126 = scmp.ne.s32.totalorder %s115, %s118
      %p127 = scmp.eq.s32.totalorder %s16, 5
      %p128 = por %p126, %p127
      %p129 = scmp.ne.s32.totalorder %s118, %s119
      %p130 = scmp.eq.s32.totalorder %s16, 0
      %p131 = por %p129, %p130
      %p132 = scmp.ne.s32.totalorder %s118, %s119
      %p133 = scmp.eq.s32.totalorder %s17, 5
      %p134 = por %p132, %p133
      %p136 = scmp.ne.s32.totalorder %s119, %s135
      %p137 = scmp.eq.s32.totalorder %s17, 0
      %p138 = por %p136, %p137
      %p139 = scmp.le.s32.totalorder 1, %s11
      %p140 = scmp.lt.s32.totalorder %s11, 7
      %p141 = pnand %p139, %p140
      %p142 = pneg %p141
      // Predicated region
      $region9: #{tpu_custom_call.1} parent=5 // pred_check
        _
      $region10: #{tpu_custom_call.1} parent=5 // pred_check_branch
        %144 = sbr.rel (%p141) target = $region12
      $region11: #{tpu_custom_call.1} parent=5 // pred_region
        %s145 = ssub.s32 %s11, 1
        // Predicated region
        $region13: #{tpu_custom_call.1} parent=11 // pred_check
          %p146 = pneg %p77
        $region14: #{tpu_custom_call.1} parent=11 // pred_check_branch
          %148 = sbr.rel (%p146) target = $region16
        $region15: #{tpu_custom_call.1} parent=11 // pred_region
          %p149 = scmp.lt.s32.totalorder %s20, 1
          %s150 = scalar_select %p149, %s20, 1
          %s151 = smul.addr %s150, 8
          %s152 = scalar_lea.vmem %s1, %s151
        $region16: #{tpu_custom_call.1} parent=11 // pred_fallthru
          _
      $region12: #{tpu_custom_call.1} parent=5 // pred_fallthru
        _
      %p153 = scmp.lt.s32.totalorder %s11, 6
      // Predicated region
      $region17: #{tpu_custom_call.1} parent=5 // pred_check
        %p154 = pneg %p153
      $region18: #{tpu_custom_call.1} parent=5 // pred_check_branch
        %156 = sbr.rel (%p154) target = $region20
      $region19: #{tpu_custom_call.1} parent=5 // pred_region
        // Predicated region
        $region21: #{tpu_custom_call.1} parent=19 // pred_check
          %p157 = pneg %p45
        $region22: #{tpu_custom_call.1} parent=19 // pred_check_branch
          %159 = sbr.rel (%p157) target = $region24
        $region23: #{tpu_custom_call.1} parent=19 // pred_region
          %p160 = scmp.lt.s32.totalorder %s18, 1
          %s161 = scalar_select %p160, %s18, 1
          %p162 = scmp.lt.s32.totalorder %s19, 2
          %s163 = scalar_select %p162, %s19, 2
          %s164 = smul.addr %s161, 3
          %s165 = sadd.s32 %s163, %s164
          %s166 = smul.addr %s165, 8
          %s167 = scalar_lea.vmem %s0, %s166
        $region24: #{tpu_custom_call.1} parent=19 // pred_fallthru
          _
      $region20: #{tpu_custom_call.1} parent=5 // pred_fallthru
        _
      %p168 = scmp.le.s32.totalorder 1, %s11
      %p169 = scmp.lt.s32.totalorder %s11, 7
      %p170 = pnand %p168, %p169
      %p171 = pneg %p170
      // Predicated region
      $region25: #{tpu_custom_call.1} parent=5 // pred_check
        _
      $region26: #{tpu_custom_call.1} parent=5 // pred_check_branch
        %173 = sbr.rel (%p170) target = $region28
      $region27: #{tpu_custom_call.1} parent=5 // pred_region
        %s174 = ssub.s32 %s11, 1
        %p175 = scmp.lt.s32.totalorder %s20, 1
        %s176 = scalar_select %p175, %s20, 1
        %p177 = scmp.lt.s32.totalorder %s21, 2
        %s178 = scalar_select %p177, %s21, 2
        %s179 = smul.addr %s176, 3
        %s180 = sadd.s32 %s178, %s179
        %s181 = smul.addr %s180, 8
        %s182 = scalar_lea.vmem %s0, %s181
        %p183 = pneg %p51
        %p184 = pneg %p48
        %p185 = scmp.lt.s32.totalorder %s20, 1
        %s186 = scalar_select %p185, %s20, 1
        %s187 = smul.addr %s186, 8
        %s188 = scalar_lea.vmem %s1, %s187
        %p189 = pneg %p77
        %p190 = pneg %p74
        %p191 = pneg %p105
        %p192 = pneg %p102
        %p193 = scmp.lt.s32.totalorder %s20, 1
        %s194 = scalar_select %p193, %s20, 1
        %p195 = scmp.lt.s32.totalorder %s21, 2
        %s196 = scalar_select %p195, %s21, 2
        %s197 = smul.addr %s194, 3
        %s198 = sadd.s32 %s196, %s197
        %s199 = smul.addr %s198, 8
        %s200 = scalar_lea.vmem %s2, %s199
        %p201 = pneg %p131
        %p202 = pneg %p128
        %p203 = scmp.lt.s32.totalorder %s20, 1
        %s204 = scalar_select %p203, %s20, 1
        %p205 = scmp.lt.s32.totalorder %s21, 2
        %s206 = scalar_select %p205, %s21, 2
        %s207 = smul.addr %s204, 3
        %s208 = sadd.s32 %s206, %s207
        %s209 = smul.addr %s208, 8
        %s210 = scalar_lea.vmem %s0, %s209
        %p211 = scmp.lt.s32.totalorder %s20, 1
        %s212 = scalar_select %p211, %s20, 1
        %s213 = smul.addr %s212, 8
        %s214 = scalar_lea.vmem %s1, %s213
        %p215 = scmp.lt.s32.totalorder %s20, 1
        %s216 = scalar_select %p215, %s20, 1
        %p217 = scmp.lt.s32.totalorder %s21, 2
        %s218 = scalar_select %p217, %s21, 2
        %s219 = smul.addr %s216, 3
        %s220 = sadd.s32 %s218, %s219
        %s221 = smul.addr %s220, 8
        %s222 = scalar_lea.vmem %s2, %s221
        %v223 = vld [vmem:[%s210] sm:$0xff]
        %v224 = vld [vmem:[%s214] sm:$0xff]
        %225 = vmatprep.subr.mxu0 0.0
        %226 = vmatpush1.xpose.msra.mxu0 0.0
        %227 = vmatprep.subr.mxu0 0.0
        %228 = vmatpush1.xpose.msra.mxu0 0.0
        %229 = vmatprep.subr.mxu0 0.0
        %230 = vmatpush1.xpose.msra.mxu0 0.0
        %231 = vmatprep.subr.mxu0 0.0
        %232 = vmatpush1.xpose.msra.mxu0 0.0
        %233 = vmatprep.subr.mxu0 0.0
        %234 = vmatpush1.xpose.msra.mxu0 0.0
        %235 = vmatprep.subr.mxu0 0.0
        %236 = vmatpush1.xpose.msra.mxu0 0.0
        %237 = vmatprep.subr.mxu0 0.0
        %238 = vmatpush1.xpose.msra.mxu0 0.0
        %239 = vmatprep.subr.mxu0 0.0
        %240 = vmatpush1.xpose.msra.mxu0 0.0
        %241 = vmatprep.subr.mxu0 0.0
        %242 = vmatpush1.xpose.msra.mxu0 0.0
        %243 = vmatprep.subr.mxu0 0.0
        %244 = vmatpush1.xpose.msra.mxu0 0.0
        %245 = vmatprep.subr.mxu0 0.0
        %246 = vmatpush1.xpose.msra.mxu0 0.0
        %247 = vmatprep.subr.mxu0 0.0
        %248 = vmatpush1.xpose.msra.mxu0 0.0
        %249 = vmatprep.subr.mxu0 0.0
        %250 = vmatpush1.xpose.msra.mxu0 0.0
        %251 = vmatprep.subr.mxu0 0.0
        %252 = vmatpush1.xpose.msra.mxu0 0.0
        %253 = vmatprep.subr.mxu0 0.0
        %254 = vmatpush1.xpose.msra.mxu0 0.0
        %255 = vmatprep.subr.mxu0 0.0
        %256 = vmatpush1.xpose.msra.mxu0 %v224
        %257 = vmatprep.subr.mxu0 0.0
        %258 = vmatpush2.xpose.msra.mxu0 0.0
        %259 = vmatprep.subr.mxu0 0.0
        %260 = vmatpush2.xpose.msra.mxu0 0.0
        %261 = vmatprep.subr.mxu0 0.0
        %262 = vmatpush2.xpose.msra.mxu0 0.0
        %263 = vmatprep.subr.mxu0 0.0
        %264 = vmatpush2.xpose.msra.mxu0 0.0
        %265 = vmatprep.subr.mxu0 0.0
        %266 = vmatpush2.xpose.msra.mxu0 0.0
        %267 = vmatprep.subr.mxu0 0.0
        %268 = vmatpush2.xpose.msra.mxu0 0.0
        %269 = vmatprep.subr.mxu0 0.0
        %270 = vmatpush2.xpose.msra.mxu0 0.0
        %271 = vmatprep.subr.mxu0 0.0
        %272 = vmatpush2.xpose.msra.mxu0 0.0
        %273 = vmatprep.subr.mxu0 0.0
        %274 = vmatpush2.xpose.msra.mxu0 0.0
        %275 = vmatprep.subr.mxu0 0.0
        %276 = vmatpush2.xpose.msra.mxu0 0.0
        %277 = vmatprep.subr.mxu0 0.0
        %278 = vmatpush2.xpose.msra.mxu0 0.0
        %279 = vmatprep.subr.mxu0 0.0
        %280 = vmatpush2.xpose.msra.mxu0 0.0
        %281 = vmatprep.subr.mxu0 0.0
        %282 = vmatpush2.xpose.msra.mxu0 0.0
        %283 = vmatprep.subr.mxu0 0.0
        %284 = vmatpush2.xpose.msra.mxu0 0.0
        %285 = vmatprep.subr.mxu0 0.0
        %286 = vmatpush2.xpose.msra.mxu0 0.0
        %287 = vmatprep.subr.mxu0 0.0
        %288 = vmatpush2.xpose.msra.mxu0 0.0
        %289 = vmatprep.mubr.f32.mxu0 0.0
        %290 = vmatmul.mubr.f32.gmra.mxu0 %v223
        %v291 = vpop.f32.mrf.mxu0
        %v292 = vadd.f32 0.0, %v291
        %v293 = vpop.f32.mrf.mxu0
        %294 = vdwg.mxu0
        %vm295 = vcmask 64512
        %v296 = vsel %vm295, %v292, -inf
        %297 = vmax.xlane.f32.xlu0 %v296
        %v298 = vpop.xlane.xlu0 %297
        %v299 = vsub.f32 %v292, %v298
        %v300 = vmul.f32 %v299, 1.442695
        %v301 = vpow.pop %v300
        %v302 = vsel %vm295, %v301, 0.0
        %303 = vadd.xlane.f32.xlu0 %v302
        %v304 = vpop.xlane.xlu0 %303
        %v305 = vrcp.pop %v304
        %v307 = vsel %vm295, %v301, 0
        %309 = vmatprep.subr.mxu0 0.0
        %310 = vmatpush1.msra.mxu0 0.0
        %311 = vmatprep.subr.mxu0 0.0
        %312 = vmatpush1.msra.mxu0 0.0
        %313 = vmatprep.subr.mxu0 0.0
        %314 = vmatpush1.msra.mxu0 0.0
        %315 = vmatprep.subr.mxu0 0.0
        %316 = vmatpush1.msra.mxu0 0.0
        %317 = vmatprep.subr.mxu0 0.0
        %318 = vmatpush1.msra.mxu0 0.0
        %319 = vmatprep.subr.mxu0 0.0
        %320 = vmatpush1.msra.mxu0 0.0
        %321 = vmatprep.subr.mxu0 0.0
        %322 = vmatpush1.msra.mxu0 0.0
        %323 = vmatprep.subr.mxu0 0.0
        %324 = vmatpush1.msra.mxu0 0.0
        %325 = vmatprep.subr.mxu0 0.0
        %326 = vmatpush1.msra.mxu0 0.0
        %327 = vmatprep.subr.mxu0 0.0
        %328 = vmatpush1.msra.mxu0 0.0
        %329 = vmatprep.subr.mxu0 0.0
        %330 = vmatpush1.msra.mxu0 0.0
        %331 = vmatprep.subr.mxu0 0.0
        %332 = vmatpush1.msra.mxu0 0.0
        %333 = vmatprep.subr.mxu0 0.0
        %334 = vmatpush1.msra.mxu0 0.0
        %335 = vmatprep.subr.mxu0 0.0
        %336 = vmatpush1.msra.mxu0 0.0
        %337 = vmatprep.subr.mxu0 0.0
        %338 = vmatpush1.msra.mxu0 0.0
        %339 = vmatprep.subr.mxu0 0.0
        %340 = vmatpush1.msra.mxu0 %v224
        %341 = vmatprep.subr.mxu0 0.0
        %342 = vmatpush2.msra.mxu0 0.0
        %343 = vmatprep.subr.mxu0 0.0
        %344 = vmatpush2.msra.mxu0 0.0
        %345 = vmatprep.subr.mxu0 0.0
        %346 = vmatpush2.msra.mxu0 0.0
        %347 = vmatprep.subr.mxu0 0.0
        %348 = vmatpush2.msra.mxu0 0.0
        %349 = vmatprep.subr.mxu0 0.0
        %350 = vmatpush2.msra.mxu0 0.0
        %351 = vmatprep.subr.mxu0 0.0
        %352 = vmatpush2.msra.mxu0 0.0
        %353 = vmatprep.subr.mxu0 0.0
        %354 = vmatpush2.msra.mxu0 0.0
        %355 = vmatprep.subr.mxu0 0.0
        %356 = vmatpush2.msra.mxu0 0.0
        %357 = vmatprep.subr.mxu0 0.0
        %358 = vmatpush2.msra.mxu0 0.0
        %359 = vmatprep.subr.mxu0 0.0
        %360 = vmatpush2.msra.mxu0 0.0
        %361 = vmatprep.subr.mxu0 0.0
        %362 = vmatpush2.msra.mxu0 0.0
        %363 = vmatprep.subr.mxu0 0.0
        %364 = vmatpush2.msra.mxu0 0.0
        %365 = vmatprep.subr.mxu0 0.0
        %366 = vmatpush2.msra.mxu0 0.0
        %367 = vmatprep.subr.mxu0 0.0
        %368 = vmatpush2.msra.mxu0 0.0
        %369 = vmatprep.subr.mxu0 0.0
        %370 = vmatpush2.msra.mxu0 0.0
        %371 = vmatprep.subr.mxu0 0.0
        %372 = vmatpush2.msra.mxu0 0.0
        %373 = vmatprep.mubr.f32.mxu0 0.0
        %374 = vmatmul.mubr.f32.gmra.mxu0 %v307
        %v375 = vpop.f32.mrf.mxu0
        %v376 = vadd.f32 0.0, %v375
        %v377 = vpop.f32.mrf.mxu0
        %378 = vdwg.mxu0
        %v379 = vmul.f32 %v376, %v305
        %380 = vst [vmem:[%s222] sm:$0xff] %v379
        %p381 = scmp.eq.s32.totalorder %s21, 0
        // Predicated region
        $region29: #{tpu_custom_call.1} parent=27 // pred_check
          %p382 = pneg %p381
        $region30: #{tpu_custom_call.1} parent=27 // pred_check_branch
          %384 = sbr.rel (%p382) target = $region32
        $region31: #{tpu_custom_call.1} parent=27 // pred_region
          %vm385 = vcmask 57344
          %386 = vst.msk [vmem:[#allocation2] sm:$0x1] %vm385, -inf
          %387 = vst.msk [vmem:[#allocation3] sm:$0x1] %vm385, 0.0
          %388 = vst [vmem:[#allocation4] sm:$0xff] 0.0
        $region32: #{tpu_custom_call.1} parent=27 // pred_fallthru
          _
        %s389 = smul.u32 %s21, 8
        %v390 = vlaneseq
        %v391 = vshrl.u32 %v390, 7
        %v392 = vstv %s389
        %v393 = vadd.s32 %v392, %v391
        %vm394 = vcmp.lt.s32.totalorder %v393, 20
        %v395 = vsel %vm394, 1, 0
        %vm396 = vcmp.eq.s32.totalorder %v395, 1
        %v397 = vsel %vm396, %v292, -inf
        %v398 = vsel %vm396, %v223, 0.0
        %v399 = vld [vmem:[#allocation2] sm:$0x1]
        %v400 = vsel %vm295, %v397, -inf
        %v401 = vrot.slane %v400, 4
        %v402 = vmax.f32 %v400, %v401
        %v403 = vrot.slane %v402, 2
        %v404 = vmax.f32 %v402, %v403
        %v405 = vrot.slane %v404, 1
        %v406 = vmax.f32 %v404, %v405
        %v407 = vmax.f32 %v399, %v406
        %v408 = vsub.f32 %v399, %v407
        %v409 = vmul.f32 %v408, 1.442695
        %v410 = vpow.pop %v409
        %v412 = vlaneseq
        %v413 = vshrl.u32 %v412, 7
        %v414 = vsub.s32 0, %v413
        %v415 = vrot.slane %v407, %v414
        %v417 = vsub.f32 %v397, %v415
        %v418 = vmul.f32 %v417, 1.442695
        %v419 = vpow.pop %v418
        %v420 = vld [vmem:[#allocation3] sm:$0x1]
        %v421 = vmul.f32 %v410, %v420
        %v422 = vsel %vm295, %v419, 0.0
        %v423 = vrot.slane %v422, 4
        %v424 = vadd.f32 %v422, %v423
        %v425 = vrot.slane %v424, 2
        %v426 = vadd.f32 %v424, %v425
        %v427 = vrot.slane %v426, 1
        %v428 = vadd.f32 %v426, %v427
        %v429 = vadd.f32 %v421, %v428
        %vm430 = vcmask 57344
        %431 = vst.msk [vmem:[#allocation3] sm:$0x1] %vm430, %v429
        %432 = vxpose.xlu0.b32.start [1/16] %v419, 128
        %433 = vxpose.xlu0.b32.cont [2/16] 0.0, 128
        %434 = vxpose.xlu0.b32.cont [3/16] 0.0, 128
        %435 = vxpose.xlu0.b32.cont [4/16] 0.0, 128
        %436 = vxpose.xlu0.b32.cont [5/16] 0.0, 128
        %437 = vxpose.xlu0.b32.cont [6/16] 0.0, 128
        %438 = vxpose.xlu0.b32.cont [7/16] 0.0, 128
        %439 = vxpose.xlu0.b32.cont [8/16] 0.0, 128
        %440 = vxpose.xlu0.b32.cont [9/16] 0.0, 128
        %441 = vxpose.xlu0.b32.cont [10/16] 0.0, 128
        %442 = vxpose.xlu0.b32.cont [11/16] 0.0, 128
        %443 = vxpose.xlu0.b32.cont [12/16] 0.0, 128
        %444 = vxpose.xlu0.b32.cont [13/16] 0.0, 128
        %445 = vxpose.xlu0.b32.cont [14/16] 0.0, 128
        %446 = vxpose.xlu0.b32.cont [15/16] 0.0, 128
        %447 = vxpose.xlu0.b32.end [16/16] 0.0, 128
        %v448 = vpop.trf.xlu0
        %v449 = vpop.trf.xlu0
        %v450 = vpop.trf.xlu0
        %v451 = vpop.trf.xlu0
        %v452 = vpop.trf.xlu0
        %v453 = vpop.trf.xlu0
        %v454 = vpop.trf.xlu0
        %v455 = vpop.trf.xlu0
        %v456 = vpop.trf.xlu0
        %v457 = vpop.trf.xlu0
        %v458 = vpop.trf.xlu0
        %v459 = vpop.trf.xlu0
        %v460 = vpop.trf.xlu0
        %v461 = vpop.trf.xlu0
        %v462 = vpop.trf.xlu0
        %v463 = vpop.trf.xlu0
        %v465 = vsel %vm295, %v448, 0
        %467 = vmatprep.subr.mxu0 0.0
        %468 = vmatpush1.msra.mxu0 0.0
        %469 = vmatprep.subr.mxu0 0.0
        %470 = vmatpush1.msra.mxu0 0.0
        %471 = vmatprep.subr.mxu0 0.0
        %472 = vmatpush1.msra.mxu0 0.0
        %473 = vmatprep.subr.mxu0 0.0
        %474 = vmatpush1.msra.mxu0 0.0
        %475 = vmatprep.subr.mxu0 0.0
        %476 = vmatpush1.msra.mxu0 0.0
        %477 = vmatprep.subr.mxu0 0.0
        %478 = vmatpush1.msra.mxu0 0.0
        %479 = vmatprep.subr.mxu0 0.0
        %480 = vmatpush1.msra.mxu0 0.0
        %481 = vmatprep.subr.mxu0 0.0
        %482 = vmatpush1.msra.mxu0 0.0
        %483 = vmatprep.subr.mxu0 0.0
        %484 = vmatpush1.msra.mxu0 0.0
        %485 = vmatprep.subr.mxu0 0.0
        %486 = vmatpush1.msra.mxu0 0.0
        %487 = vmatprep.subr.mxu0 0.0
        %488 = vmatpush1.msra.mxu0 0.0
        %489 = vmatprep.subr.mxu0 0.0
        %490 = vmatpush1.msra.mxu0 0.0
        %491 = vmatprep.subr.mxu0 0.0
        %492 = vmatpush1.msra.mxu0 0.0
        %493 = vmatprep.subr.mxu0 0.0
        %494 = vmatpush1.msra.mxu0 0.0
        %495 = vmatprep.subr.mxu0 0.0
        %496 = vmatpush1.msra.mxu0 0.0
        %497 = vmatprep.subr.mxu0 0.0
        %498 = vmatpush1.msra.mxu0 %v398
        %499 = vmatprep.subr.mxu0 0.0
        %500 = vmatpush2.msra.mxu0 0.0
        %501 = vmatprep.subr.mxu0 0.0
        %502 = vmatpush2.msra.mxu0 0.0
        %503 = vmatprep.subr.mxu0 0.0
        %504 = vmatpush2.msra.mxu0 0.0
        %505 = vmatprep.subr.mxu0 0.0
        %506 = vmatpush2.msra.mxu0 0.0
        %507 = vmatprep.subr.mxu0 0.0
        %508 = vmatpush2.msra.mxu0 0.0
        %509 = vmatprep.subr.mxu0 0.0
        %510 = vmatpush2.msra.mxu0 0.0
        %511 = vmatprep.subr.mxu0 0.0
        %512 = vmatpush2.msra.mxu0 0.0
        %513 = vmatprep.subr.mxu0 0.0
        %514 = vmatpush2.msra.mxu0 0.0
        %515 = vmatprep.subr.mxu0 0.0
        %516 = vmatpush2.msra.mxu0 0.0
        %517 = vmatprep.subr.mxu0 0.0
        %518 = vmatpush2.msra.mxu0 0.0
        %519 = vmatprep.subr.mxu0 0.0
        %520 = vmatpush2.msra.mxu0 0.0
        %521 = vmatprep.subr.mxu0 0.0
        %522 = vmatpush2.msra.mxu0 0.0
        %523 = vmatprep.subr.mxu0 0.0
        %524 = vmatpush2.msra.mxu0 0.0
        %525 = vmatprep.subr.mxu0 0.0
        %526 = vmatpush2.msra.mxu0 0.0
        %527 = vmatprep.subr.mxu0 0.0
        %528 = vmatpush2.msra.mxu0 0.0
        %529 = vmatprep.subr.mxu0 0.0
        %530 = vmatpush2.msra.mxu0 0.0
        %531 = vmatprep.mubr.f32.mxu0 0.0
        %532 = vmatmul.mubr.f32.gmra.mxu0 %v465
        %v533 = vpop.f32.mrf.mxu0
        %v534 = vadd.f32 0.0, %v533
        %v535 = vpop.f32.mrf.mxu0
        %536 = vdwg.mxu0
        %537 = vxpose.xlu0.b32.start [1/16] %v410, 128
        %538 = vxpose.xlu0.b32.cont [2/16] 0.0, 128
        %539 = vxpose.xlu0.b32.cont [3/16] 0.0, 128
        %540 = vxpose.xlu0.b32.cont [4/16] 0.0, 128
        %541 = vxpose.xlu0.b32.cont [5/16] 0.0, 128
        %542 = vxpose.xlu0.b32.cont [6/16] 0.0, 128
        %543 = vxpose.xlu0.b32.cont [7/16] 0.0, 128
        %544 = vxpose.xlu0.b32.cont [8/16] 0.0, 128
        %545 = vxpose.xlu0.b32.cont [9/16] 0.0, 128
        %546 = vxpose.xlu0.b32.cont [10/16] 0.0, 128
        %547 = vxpose.xlu0.b32.cont [11/16] 0.0, 128
        %548 = vxpose.xlu0.b32.cont [12/16] 0.0, 128
        %549 = vxpose.xlu0.b32.cont [13/16] 0.0, 128
        %550 = vxpose.xlu0.b32.cont [14/16] 0.0, 128
        %551 = vxpose.xlu0.b32.cont [15/16] 0.0, 128
        %552 = vxpose.xlu0.b32.end [16/16] 0.0, 128
        %v553 = vpop.trf.xlu0
        %v554 = vpop.trf.xlu0
        %v555 = vpop.trf.xlu0
        %v556 = vpop.trf.xlu0
        %v557 = vpop.trf.xlu0
        %v558 = vpop.trf.xlu0
        %v559 = vpop.trf.xlu0
        %v560 = vpop.trf.xlu0
        %v561 = vpop.trf.xlu0
        %v562 = vpop.trf.xlu0
        %v563 = vpop.trf.xlu0
        %v564 = vpop.trf.xlu0
        %v565 = vpop.trf.xlu0
        %v566 = vpop.trf.xlu0
        %v567 = vpop.trf.xlu0
        %v568 = vpop.trf.xlu0
        %v569 = vld [vmem:[#allocation4] sm:$0xff]
        %571 = vset.pattern.permute.xlu0 0
        %572 = vperm.xlu0 %571, %v553
        %v573 = vpop.permute.xlu0 %572
        %v575 = vmul.f32 %v573, %v569
        %v576 = vadd.f32 %v575, %v534
        %577 = vst [vmem:[#allocation4] sm:$0xff] %v576
        %578 = vst.msk [vmem:[#allocation2] sm:$0x1] %vm430, %v407
        %p579 = scmp.eq.s32.totalorder %s21, 2
        // Predicated region
        $region33: #{tpu_custom_call.1} parent=27 // pred_check
          %p580 = pneg %p579
        $region34: #{tpu_custom_call.1} parent=27 // pred_check_branch
          %582 = sbr.rel (%p580) target = $region36
        $region35: #{tpu_custom_call.1} parent=27 // pred_region
          %v583 = vld [vmem:[#allocation3] sm:$0x1]
          %v584 = vrcp.pop %v583
          %v585 = vld [vmem:[#allocation4] sm:$0xff]
          %586 = vxpose.xlu0.b32.start [1/16] %v584, 128
          %587 = vxpose.xlu0.b32.cont [2/16] 0.0, 128
          %588 = vxpose.xlu0.b32.cont [3/16] 0.0, 128
          %589 = vxpose.xlu0.b32.cont [4/16] 0.0, 128
          %590 = vxpose.xlu0.b32.cont [5/16] 0.0, 128
          %591 = vxpose.xlu0.b32.cont [6/16] 0.0, 128
          %592 = vxpose.xlu0.b32.cont [7/16] 0.0, 128
          %593 = vxpose.xlu0.b32.cont [8/16] 0.0, 128
          %594 = vxpose.xlu0.b32.cont [9/16] 0.0, 128
          %595 = vxpose.xlu0.b32.cont [10/16] 0.0, 128
          %596 = vxpose.xlu0.b32.cont [11/16] 0.0, 128
          %597 = vxpose.xlu0.b32.cont [12/16] 0.0, 128
          %598 = vxpose.xlu0.b32.cont [13/16] 0.0, 128
          %599 = vxpose.xlu0.b32.cont [14/16] 0.0, 128
          %600 = vxpose.xlu0.b32.cont [15/16] 0.0, 128
          %601 = vxpose.xlu0.b32.end [16/16] 0.0, 128
          %v602 = vpop.trf.xlu0
          %v603 = vpop.trf.xlu0
          %v604 = vpop.trf.xlu0
          %v605 = vpop.trf.xlu0
          %v606 = vpop.trf.xlu0
          %v607 = vpop.trf.xlu0
          %v608 = vpop.trf.xlu0
          %v609 = vpop.trf.xlu0
          %v610 = vpop.trf.xlu0
          %v611 = vpop.trf.xlu0
          %v612 = vpop.trf.xlu0
          %v613 = vpop.trf.xlu0
          %v614 = vpop.trf.xlu0
          %v615 = vpop.trf.xlu0
          %v616 = vpop.trf.xlu0
          %v617 = vpop.trf.xlu0
          %619 = vset.pattern.permute.xlu0 0
          %620 = vperm.xlu0 %619, %v602
          %v621 = vpop.permute.xlu0 %620
          %v623 = vmul.f32 %v585, %v621
          %624 = vst [vmem:[#allocation5] sm:$0xff] %v623
        $region36: #{tpu_custom_call.1} parent=27 // pred_fallthru
          _
        %p625 = scmp.lt.s32.totalorder %s20, 1
        %s626 = scalar_select %p625, %s20, 1
        %p627 = scmp.lt.s32.totalorder %s21, 2
        %s628 = scalar_select %p627, %s21, 2
        %s629 = smul.addr %s626, 3
        %s630 = sadd.s32 %s628, %s629
        %s631 = smul.addr %s630, 8
        %s632 = scalar_lea.vmem %s2, %s631
        // Predicated region
        $region37: #{tpu_custom_call.1} parent=27 // pred_check
          %p633 = pneg %p102
        $region38: #{tpu_custom_call.1} parent=27 // pred_check_branch
          %635 = sbr.rel (%p633) target = $region40
        $region39: #{tpu_custom_call.1} parent=27 // pred_region
          _
        $region40: #{tpu_custom_call.1} parent=27 // pred_fallthru
          _
        // Predicated region
        $region41: #{tpu_custom_call.1} parent=27 // pred_check
          %p636 = pneg %p128
        $region42: #{tpu_custom_call.1} parent=27 // pred_check_branch
          %638 = sbr.rel (%p636) target = $region44
        $region43: #{tpu_custom_call.1} parent=27 // pred_region
          %s640 = ssub.s32 128, 128
          %641 = vsyncadd [#allocation6], %s640
          %s642 = smul.addr %s20, 128
          %s643 = scalar_lea.hbm %s3, %s642
          %s645 = sshll.u32 [#allocation5], 4
          %s646 = int_to_ptr.vmem [resolvable:$true] %s645
          %648 = dma.vmem_to_hbm [thread:$0]  %s646, 128, %s643, [#allocation6]
        $region44: #{tpu_custom_call.1} parent=27 // pred_fallthru
          _
        // Predicated region
        $region45: #{tpu_custom_call.1} parent=27 // pred_check
          %p649 = pneg %p128
        $region46: #{tpu_custom_call.1} parent=27 // pred_check_branch
          %651 = sbr.rel (%p649) target = $region48
        $region47: #{tpu_custom_call.1} parent=27 // pred_region
          %652 = dma.done [#allocation6], 128
        $region48: #{tpu_custom_call.1} parent=27 // pred_fallthru
          _
      $region28: #{tpu_custom_call.1} parent=5 // pred_fallthru
        _
      %p653 = scmp.le.s32.totalorder 2, %s11
      // Predicated region
      $region49: #{tpu_custom_call.1} parent=5 // pred_check
        %p654 = pneg %p653
      $region50: #{tpu_custom_call.1} parent=5 // pred_check_branch
        %656 = sbr.rel (%p654) target = $region52
      $region51: #{tpu_custom_call.1} parent=5 // pred_region
        %s657 = ssub.s32 %s11, 2
        // Predicated region
        $region53: #{tpu_custom_call.1} parent=51 // pred_check
          %p658 = pneg %p108
        $region54: #{tpu_custom_call.1} parent=51 // pred_check_branch
          %660 = sbr.rel (%p658) target = $region56
        $region55: #{tpu_custom_call.1} parent=51 // pred_region
          %p661 = scmp.lt.s32.totalorder %s22, 1
          %s662 = scalar_select %p661, %s22, 1
          %p663 = scmp.lt.s32.totalorder %s23, 2
          %s664 = scalar_select %p663, %s23, 2
          %s665 = smul.addr %s662, 3
          %s666 = sadd.s32 %s664, %s665
          %s667 = smul.addr %s666, 8
          %s668 = scalar_lea.vmem %s2, %s667
        $region56: #{tpu_custom_call.1} parent=51 // pred_fallthru
          _
      $region52: #{tpu_custom_call.1} parent=5 // pred_fallthru
        _
    $region6: #{tpu_custom_call.1} parent=1 // loop_footer
      %s15 = sadd.s32 1, %s11
    $region7: #{tpu_custom_call.1} parent=1 // loop_footer_branch
      %10 = sbr.rel target = $region3
    $region8: #{tpu_custom_call.1} parent=1 // loop_exit
      _
    %669 = vsyncpa [#allocation6], 1
    %s670 = scalar_lea.sflag [#allocation6], 1
    %671 = vsyncpa %s670, 1

// kernel: tpu_custom_call.1
$region0: #{tpu_custom_call.1}
  #allocation0 [shape = 'u32[]', space=smem, size = 0x4, offset = 0x4, fixed_abs, tag = 'smem constant byte address 0x4 - core index']
  #allocation1 [shape = 'u32[144,128]{1,0:T(1,128)}', space=vmem, size = 0x12000, scoped, tag = 'internal scratch']
  #allocation2 [shape = 'f32[1,8]{1,0:T(1,128)}', space=vmem, size = 0x200, scoped, tag = 'scratch operand']
  #allocation3 [shape = 'f32[1,8]{1,0:T(1,128)}', space=vmem, size = 0x200, scoped, tag = 'scratch operand']
  #allocation4 [shape = 'f32[8,128]{1,0:T(8,128)}', space=vmem, size = 0x1000, scoped, tag = 'scratch operand']
  %s0 = inlined_call_operand.vmem [shape: f32[2,20,128], index: 0, kind: input, shape index: {}]
  %s1 = inlined_call_operand.vmem [shape: f32[2,8,128], index: 1, kind: input, shape index: {}]
  %s2 = inlined_call_operand.vmem [shape: f32[2,20,128], index: 2, kind: output, shape index: {0}]
  %s3 = inlined_call_operand.hbm [shape: f32[2,8,128], index: 3, kind: output, shape index: {1}]
  %4 = xla_tuple %s2, %s3
  %s5 = sld [smem:[#allocation0]]
  $region57: #{tpu_custom_call.1} parent=0
    _
  %s7 = ssub.s32 1, %s5
  %s8 = scalar_select 0, %s7, %s5
  $region1: #{tpu_custom_call.1} parent=0
    #allocation5 [shape = 'u8[8192]{0}', space=vmem, size = 0x2000, scoped, tag = 'output window, operand 1']
    #allocation6 [shape = 's32[2]{0}', space=sflag, size = 0x8, scoped, tag = 'scoped memory for tpu_custom_call.1']
    %9 = vsyncpa [#allocation6], 0
    %s10 = scalar_lea.sflag [#allocation6], 1
    %11 = vsyncpa %s10, 0
    loop: start=0, step=1, limit=8
    $region2: #{tpu_custom_call.1} parent=1 // loop_pre_header
      _
    $region3: #{tpu_custom_call.1} parent=1 // loop_header
      %s13 = sphi 0, %s17
      %p14 = scmp.ge.s32.totalorder %s13, 8
      %s20 = sphi 0, %s32
      %s21 = sphi 0, %s28
      %s22 = sphi 0, %s20
      %s23 = sphi 0, %s21
      %s24 = sphi 0, %s22
      %s25 = sphi 0, %s23
      %s37 = sphi 0, %s39
      %s40 = sphi 0, %s37
      %s41 = sphi 0, %s40
      %s57 = sphi 0, %s41
      %s63 = sphi 0, %s65
      %s66 = sphi 0, %s63
      %s67 = sphi 0, %s66
      %s83 = sphi 0, %s67
      %s91 = sphi 0, %s93
      %s94 = sphi 0, %s91
      %s95 = sphi 0, %s94
      %s111 = sphi 0, %s95
      %s117 = sphi 0, %s119
      %s120 = sphi 0, %s117
      %s121 = sphi 0, %s120
      %s137 = sphi 0, %s121
    $region4: #{tpu_custom_call.1} parent=1 // loop_header_branch
      %16 = sbr.rel (%p14) target = $region8
    $region5: #{tpu_custom_call.1} parent=1 // loop_body
      %s18 = ssub.s32 %s13, 1
      %s19 = ssub.s32 %s13, 2
      %s26 = sadd.s32 1, %s21
      %p27 = scmp.ge.s32.totalorder %s26, 3
      %s28 = scalar_select %p27, 0, %s26
      %s29 = sadd.s32 1, %s20
      %s30 = scalar_select %p27, %s29, %s20
      %p31 = scmp.ge.s32.totalorder %s30, 2
      %s32 = scalar_select %p31, 0, %s30
      %s33 = ssub.s32 %s20, %s32
      %s34 = ssub.s32 %s21, %s28
      %s35 = sor.u32 %s33, %s34
      %p36 = scmp.eq.s32.totalorder %s35, 0
      %s38 = sadd.s32 %s37, 1
      %s39 = scalar_select %p36, %s37, %s38
      %p42 = pneg %p36
      %p43 = scmp.eq.s32.totalorder %s13, 5
      %p44 = por %p42, %p43
      %p45 = scmp.ne.s32.totalorder %s37, %s40
      %p46 = scmp.eq.s32.totalorder %s13, 0
      %p47 = por %p45, %p46
      %p48 = scmp.ne.s32.totalorder %s37, %s40
      %p49 = scmp.eq.s32.totalorder %s18, 5
      %p50 = por %p48, %p49
      %p51 = scmp.ne.s32.totalorder %s40, %s41
      %p52 = scmp.eq.s32.totalorder %s18, 0
      %p53 = por %p51, %p52
      %p54 = scmp.ne.s32.totalorder %s40, %s41
      %p55 = scmp.eq.s32.totalorder %s19, 5
      %p56 = por %p54, %p55
      %p58 = scmp.ne.s32.totalorder %s41, %s57
      %p59 = scmp.eq.s32.totalorder %s19, 0
      %p60 = por %p58, %p59
      %s61 = ssub.s32 %s20, %s32
      %p62 = scmp.eq.s32.totalorder %s61, 0
      %s64 = sadd.s32 %s63, 1
      %s65 = scalar_select %p62, %s63, %s64
      %p68 = pneg %p62
      %p69 = scmp.eq.s32.totalorder %s13, 5
      %p70 = por %p68, %p69
      %p71 = scmp.ne.s32.totalorder %s63, %s66
      %p72 = scmp.eq.s32.totalorder %s13, 0
      %p73 = por %p71, %p72
      %p74 = scmp.ne.s32.totalorder %s63, %s66
      %p75 = scmp.eq.s32.totalorder %s18, 5
      %p76 = por %p74, %p75
      %p77 = scmp.ne.s32.totalorder %s66, %s67
      %p78 = scmp.eq.s32.totalorder %s18, 0
      %p79 = por %p77, %p78
      %p80 = scmp.ne.s32.totalorder %s66, %s67
      %p81 = scmp.eq.s32.totalorder %s19, 5
      %p82 = por %p80, %p81
      %p84 = scmp.ne.s32.totalorder %s67, %s83
      %p85 = scmp.eq.s32.totalorder %s19, 0
      %p86 = por %p84, %p85
      %s87 = ssub.s32 %s20, %s32
      %s88 = ssub.s32 %s21, %s28
      %s89 = sor.u32 %s87, %s88
      %p90 = scmp.eq.s32.totalorder %s89, 0
      %s92 = sadd.s32 %s91, 1
      %s93 = scalar_select %p90, %s91, %s92
      %p96 = pneg %p90
      %p97 = scmp.eq.s32.totalorder %s13, 5
      %p98 = por %p96, %p97
      %p99 = scmp.ne.s32.totalorder %s91, %s94
      %p100 = scmp.eq.s32.totalorder %s13, 0
      %p101 = por %p99, %p100
      %p102 = scmp.ne.s32.totalorder %s91, %s94
      %p103 = scmp.eq.s32.totalorder %s18, 5
      %p104 = por %p102, %p103
      %p105 = scmp.ne.s32.totalorder %s94, %s95
      %p106 = scmp.eq.s32.totalorder %s18, 0
      %p107 = por %p105, %p106
      %p108 = scmp.ne.s32.totalorder %s94, %s95
      %p109 = scmp.eq.s32.totalorder %s19, 5
      %p110 = por %p108, %p109
      %p112 = scmp.ne.s32.totalorder %s95, %s111
      %p113 = scmp.eq.s32.totalorder %s19, 0
      %p114 = por %p112, %p113
      %s115 = ssub.s32 %s20, %s32
      %p116 = scmp.eq.s32.totalorder %s115, 0
      %s118 = sadd.s32 %s117, 1
      %s119 = scalar_select %p116, %s117, %s118
      %p122 = pneg %p116
      %p123 = scmp.eq.s32.totalorder %s13, 5
      %p124 = por %p122, %p123
      %p125 = scmp.ne.s32.totalorder %s117, %s120
      %p126 = scmp.eq.s32.totalorder %s13, 0
      %p127 = por %p125, %p126
      %p128 = scmp.ne.s32.totalorder %s117, %s120
      %p129 = scmp.eq.s32.totalorder %s18, 5
      %p130 = por %p128, %p129
      %p131 = scmp.ne.s32.totalorder %s120, %s121
      %p132 = scmp.eq.s32.totalorder %s18, 0
      %p133 = por %p131, %p132
      %p134 = scmp.ne.s32.totalorder %s120, %s121
      %p135 = scmp.eq.s32.totalorder %s19, 5
      %p136 = por %p134, %p135
      %p138 = scmp.ne.s32.totalorder %s121, %s137
      %p139 = scmp.eq.s32.totalorder %s19, 0
      %p140 = por %p138, %p139
      %p141 = scmp.le.s32.totalorder 1, %s13
      %p142 = scmp.lt.s32.totalorder %s13, 7
      %p143 = pnand %p141, %p142
      %p144 = pneg %p143
      // Predicated region
      $region9: #{tpu_custom_call.1} parent=5 // pred_check
        _
      $region10: #{tpu_custom_call.1} parent=5 // pred_check_branch
        %146 = sbr.rel (%p143) target = $region12
      $region11: #{tpu_custom_call.1} parent=5 // pred_region
        %s147 = ssub.s32 %s13, 1
      $region12: #{tpu_custom_call.1} parent=5 // pred_fallthru
        _
      %p148 = scmp.lt.s32.totalorder %s13, 6
      // Predicated region
      $region13: #{tpu_custom_call.1} parent=5 // pred_check
        %p149 = pneg %p148
      $region14: #{tpu_custom_call.1} parent=5 // pred_check_branch
        %151 = sbr.rel (%p149) target = $region16
      $region15: #{tpu_custom_call.1} parent=5 // pred_region
        // Predicated region
        $region17: #{tpu_custom_call.1} parent=15 // pred_check
          %p152 = pneg %p47
        $region18: #{tpu_custom_call.1} parent=15 // pred_check_branch
          %154 = sbr.rel (%p152) target = $region20
        $region19: #{tpu_custom_call.1} parent=15 // pred_region
          %p155 = scmp.lt.s32.totalorder %s20, 1
          %s156 = scalar_select %p155, %s20, 1
          %p157 = scmp.lt.s32.totalorder %s21, 2
          %s158 = scalar_select %p157, %s21, 2
          %s159 = smul.addr %s156, 3
          %s160 = sadd.s32 %s158, %s159
          %s161 = smul.addr %s160, 8
          %s162 = scalar_lea.vmem %s0, %s161
        $region20: #{tpu_custom_call.1} parent=15 // pred_fallthru
          _
        // Predicated region
        $region21: #{tpu_custom_call.1} parent=15 // pred_check
          %p163 = pneg %p73
        $region22: #{tpu_custom_call.1} parent=15 // pred_check_branch
          %165 = sbr.rel (%p163) target = $region24
        $region23: #{tpu_custom_call.1} parent=15 // pred_region
          %p166 = scmp.lt.s32.totalorder %s20, 1
          %s167 = scalar_select %p166, %s20, 1
          %s168 = smul.addr %s167, 8
          %s169 = scalar_lea.vmem %s1, %s168
        $region24: #{tpu_custom_call.1} parent=15 // pred_fallthru
          _
      $region16: #{tpu_custom_call.1} parent=5 // pred_fallthru
        _
      %p170 = scmp.le.s32.totalorder 1, %s13
      %p171 = scmp.lt.s32.totalorder %s13, 7
      %p172 = pnand %p170, %p171
      %p173 = pneg %p172
      // Predicated region
      $region25: #{tpu_custom_call.1} parent=5 // pred_check
        _
      $region26: #{tpu_custom_call.1} parent=5 // pred_check_branch
        %175 = sbr.rel (%p172) target = $region28
      $region27: #{tpu_custom_call.1} parent=5 // pred_region
        %s176 = ssub.s32 %s13, 1
        %p177 = scmp.lt.s32.totalorder %s22, 1
        %s178 = scalar_select %p177, %s22, 1
        %p179 = scmp.lt.s32.totalorder %s23, 2
        %s180 = scalar_select %p179, %s23, 2
        %s181 = smul.addr %s178, 3
        %s182 = sadd.s32 %s180, %s181
        %s183 = smul.addr %s182, 8
        %s184 = scalar_lea.vmem %s0, %s183
        %p185 = pneg %p53
        %p186 = pneg %p50
        %p187 = scmp.lt.s32.totalorder %s22, 1
        %s188 = scalar_select %p187, %s22, 1
        %s189 = smul.addr %s188, 8
        %s190 = scalar_lea.vmem %s1, %s189
        %p191 = pneg %p79
        %p192 = pneg %p76
        %p193 = pneg %p107
        %p194 = pneg %p104
        %p195 = scmp.lt.s32.totalorder %s22, 1
        %s196 = scalar_select %p195, %s22, 1
        %p197 = scmp.lt.s32.totalorder %s23, 2
        %s198 = scalar_select %p197, %s23, 2
        %s199 = smul.addr %s196, 3
        %s200 = sadd.s32 %s198, %s199
        %s201 = smul.addr %s200, 8
        %s202 = scalar_lea.vmem %s2, %s201
        %p203 = pneg %p133
        %p204 = pneg %p130
        %s205 = sand.u32 %s120, 1
        %s206 = scalar_lea.sflag [#allocation6], %s205
        %s207 = sand.u32 %s120, 1
        %s208 = smul.addr %s207, 8
        %s209 = scalar_lea.vmem [#allocation5], %s208
        %p210 = scmp.lt.s32.totalorder %s22, 1
        %s211 = scalar_select %p210, %s22, 1
        %p212 = scmp.lt.s32.totalorder %s23, 2
        %s213 = scalar_select %p212, %s23, 2
        %s214 = smul.addr %s211, 3
        %s215 = sadd.s32 %s213, %s214
        %s216 = smul.addr %s215, 8
        %s217 = scalar_lea.vmem %s0, %s216
        %p218 = scmp.lt.s32.totalorder %s22, 1
        %s219 = scalar_select %p218, %s22, 1
        %s220 = smul.addr %s219, 8
        %s221 = scalar_lea.vmem %s1, %s220
        %p222 = scmp.lt.s32.totalorder %s22, 1
        %s223 = scalar_select %p222, %s22, 1
        %p224 = scmp.lt.s32.totalorder %s23, 2
        %s225 = scalar_select %p224, %s23, 2
        %s226 = smul.addr %s223, 3
        %s227 = sadd.s32 %s225, %s226
        %s228 = smul.addr %s227, 8
        %s229 = scalar_lea.vmem %s2, %s228
        %v230 = vld [vmem:[%s217] sm:$0xff]
        %v231 = vld [vmem:[%s221] sm:$0xff]
        %232 = vmatprep.subr.mxu0 0.0
        %233 = vmatpush1.xpose.msra.mxu0 0.0
        %234 = vmatprep.subr.mxu0 0.0
        %235 = vmatpush1.xpose.msra.mxu0 0.0
        %236 = vmatprep.subr.mxu0 0.0
        %237 = vmatpush1.xpose.msra.mxu0 0.0
        %238 = vmatprep.subr.mxu0 0.0
        %239 = vmatpush1.xpose.msra.mxu0 0.0
        %240 = vmatprep.subr.mxu0 0.0
        %241 = vmatpush1.xpose.msra.mxu0 0.0
        %242 = vmatprep.subr.mxu0 0.0
        %243 = vmatpush1.xpose.msra.mxu0 0.0
        %244 = vmatprep.subr.mxu0 0.0
        %245 = vmatpush1.xpose.msra.mxu0 0.0
        %246 = vmatprep.subr.mxu0 0.0
        %247 = vmatpush1.xpose.msra.mxu0 0.0
        %248 = vmatprep.subr.mxu0 0.0
        %249 = vmatpush1.xpose.msra.mxu0 0.0
        %250 = vmatprep.subr.mxu0 0.0
        %251 = vmatpush1.xpose.msra.mxu0 0.0
        %252 = vmatprep.subr.mxu0 0.0
        %253 = vmatpush1.xpose.msra.mxu0 0.0
        %254 = vmatprep.subr.mxu0 0.0
        %255 = vmatpush1.xpose.msra.mxu0 0.0
        %256 = vmatprep.subr.mxu0 0.0
        %257 = vmatpush1.xpose.msra.mxu0 0.0
        %258 = vmatprep.subr.mxu0 0.0
        %259 = vmatpush1.xpose.msra.mxu0 0.0
        %260 = vmatprep.subr.mxu0 0.0
        %261 = vmatpush1.xpose.msra.mxu0 0.0
        %262 = vmatprep.subr.mxu0 0.0
        %263 = vmatpush1.xpose.msra.mxu0 %v231
        %264 = vmatprep.subr.mxu0 0.0
        %265 = vmatpush2.xpose.msra.mxu0 0.0
        %266 = vmatprep.subr.mxu0 0.0
        %267 = vmatpush2.xpose.msra.mxu0 0.0
        %268 = vmatprep.subr.mxu0 0.0
        %269 = vmatpush2.xpose.msra.mxu0 0.0
        %270 = vmatprep.subr.mxu0 0.0
        %271 = vmatpush2.xpose.msra.mxu0 0.0
        %272 = vmatprep.subr.mxu0 0.0
        %273 = vmatpush2.xpose.msra.mxu0 0.0
        %274 = vmatprep.subr.mxu0 0.0
        %275 = vmatpush2.xpose.msra.mxu0 0.0
        %276 = vmatprep.subr.mxu0 0.0
        %277 = vmatpush2.xpose.msra.mxu0 0.0
        %278 = vmatprep.subr.mxu0 0.0
        %279 = vmatpush2.xpose.msra.mxu0 0.0
        %280 = vmatprep.subr.mxu0 0.0
        %281 = vmatpush2.xpose.msra.mxu0 0.0
        %282 = vmatprep.subr.mxu0 0.0
        %283 = vmatpush2.xpose.msra.mxu0 0.0
        %284 = vmatprep.subr.mxu0 0.0
        %285 = vmatpush2.xpose.msra.mxu0 0.0
        %286 = vmatprep.subr.mxu0 0.0
        %287 = vmatpush2.xpose.msra.mxu0 0.0
        %288 = vmatprep.subr.mxu0 0.0
        %289 = vmatpush2.xpose.msra.mxu0 0.0
        %290 = vmatprep.subr.mxu0 0.0
        %291 = vmatpush2.xpose.msra.mxu0 0.0
        %292 = vmatprep.subr.mxu0 0.0
        %293 = vmatpush2.xpose.msra.mxu0 0.0
        %294 = vmatprep.subr.mxu0 0.0
        %295 = vmatpush2.xpose.msra.mxu0 0.0
        %296 = vmatprep.mubr.f32.mxu0 0.0
        %297 = vmatmul.mubr.f32.gmra.mxu0 %v230
        %v298 = vpop.f32.mrf.mxu0
        %v299 = vadd.f32 0.0, %v298
        %v300 = vpop.f32.mrf.mxu0
        %301 = vdwg.mxu0
        %vm302 = vcmask 64512
        %v303 = vsel %vm302, %v299, -inf
        %304 = vmax.xlane.f32.xlu0 %v303
        %v305 = vpop.xlane.xlu0 %304
        %v306 = vsub.f32 %v299, %v305
        %v307 = vmul.f32 %v306, 1.442695
        %v308 = vpow.pop %v307
        %v309 = vsel %vm302, %v308, 0.0
        %310 = vadd.xlane.f32.xlu0 %v309
        %v311 = vpop.xlane.xlu0 %310
        %v312 = vrcp.pop %v311
        %v314 = vsel %vm302, %v308, 0
        %316 = vmatprep.subr.mxu0 0.0
        %317 = vmatpush1.msra.mxu0 0.0
        %318 = vmatprep.subr.mxu0 0.0
        %319 = vmatpush1.msra.mxu0 0.0
        %320 = vmatprep.subr.mxu0 0.0
        %321 = vmatpush1.msra.mxu0 0.0
        %322 = vmatprep.subr.mxu0 0.0
        %323 = vmatpush1.msra.mxu0 0.0
        %324 = vmatprep.subr.mxu0 0.0
        %325 = vmatpush1.msra.mxu0 0.0
        %326 = vmatprep.subr.mxu0 0.0
        %327 = vmatpush1.msra.mxu0 0.0
        %328 = vmatprep.subr.mxu0 0.0
        %329 = vmatpush1.msra.mxu0 0.0
        %330 = vmatprep.subr.mxu0 0.0
        %331 = vmatpush1.msra.mxu0 0.0
        %332 = vmatprep.subr.mxu0 0.0
        %333 = vmatpush1.msra.mxu0 0.0
        %334 = vmatprep.subr.mxu0 0.0
        %335 = vmatpush1.msra.mxu0 0.0
        %336 = vmatprep.subr.mxu0 0.0
        %337 = vmatpush1.msra.mxu0 0.0
        %338 = vmatprep.subr.mxu0 0.0
        %339 = vmatpush1.msra.mxu0 0.0
        %340 = vmatprep.subr.mxu0 0.0
        %341 = vmatpush1.msra.mxu0 0.0
        %342 = vmatprep.subr.mxu0 0.0
        %343 = vmatpush1.msra.mxu0 0.0
        %344 = vmatprep.subr.mxu0 0.0
        %345 = vmatpush1.msra.mxu0 0.0
        %346 = vmatprep.subr.mxu0 0.0
        %347 = vmatpush1.msra.mxu0 %v231
        %348 = vmatprep.subr.mxu0 0.0
        %349 = vmatpush2.msra.mxu0 0.0
        %350 = vmatprep.subr.mxu0 0.0
        %351 = vmatpush2.msra.mxu0 0.0
        %352 = vmatprep.subr.mxu0 0.0
        %353 = vmatpush2.msra.mxu0 0.0
        %354 = vmatprep.subr.mxu0 0.0
        %355 = vmatpush2.msra.mxu0 0.0
        %356 = vmatprep.subr.mxu0 0.0
        %357 = vmatpush2.msra.mxu0 0.0
        %358 = vmatprep.subr.mxu0 0.0
        %359 = vmatpush2.msra.mxu0 0.0
        %360 = vmatprep.subr.mxu0 0.0
        %361 = vmatpush2.msra.mxu0 0.0
        %362 = vmatprep.subr.mxu0 0.0
        %363 = vmatpush2.msra.mxu0 0.0
        %364 = vmatprep.subr.mxu0 0.0
        %365 = vmatpush2.msra.mxu0 0.0
        %366 = vmatprep.subr.mxu0 0.0
        %367 = vmatpush2.msra.mxu0 0.0
        %368 = vmatprep.subr.mxu0 0.0
        %369 = vmatpush2.msra.mxu0 0.0
        %370 = vmatprep.subr.mxu0 0.0
        %371 = vmatpush2.msra.mxu0 0.0
        %372 = vmatprep.subr.mxu0 0.0
        %373 = vmatpush2.msra.mxu0 0.0
        %374 = vmatprep.subr.mxu0 0.0
        %375 = vmatpush2.msra.mxu0 0.0
        %376 = vmatprep.subr.mxu0 0.0
        %377 = vmatpush2.msra.mxu0 0.0
        %378 = vmatprep.subr.mxu0 0.0
        %379 = vmatpush2.msra.mxu0 0.0
        %380 = vmatprep.mubr.f32.mxu0 0.0
        %381 = vmatmul.mubr.f32.gmra.mxu0 %v314
        %v382 = vpop.f32.mrf.mxu0
        %v383 = vadd.f32 0.0, %v382
        %v384 = vpop.f32.mrf.mxu0
        %385 = vdwg.mxu0
        %v386 = vmul.f32 %v383, %v312
        %387 = vst [vmem:[%s229] sm:$0xff] %v386
        %p388 = scmp.eq.s32.totalorder %s23, 0
        // Predicated region
        $region29: #{tpu_custom_call.1} parent=27 // pred_check
          %p389 = pneg %p388
        $region30: #{tpu_custom_call.1} parent=27 // pred_check_branch
          %391 = sbr.rel (%p389) target = $region32
        $region31: #{tpu_custom_call.1} parent=27 // pred_region
          %vm392 = vcmask 57344
          %393 = vst.msk [vmem:[#allocation2] sm:$0x1] %vm392, -inf
          %394 = vst.msk [vmem:[#allocation3] sm:$0x1] %vm392, 0.0
          %395 = vst [vmem:[#allocation4] sm:$0xff] 0.0
        $region32: #{tpu_custom_call.1} parent=27 // pred_fallthru
          _
        %s396 = smul.u32 %s23, 8
        %v397 = vlaneseq
        %v398 = vshrl.u32 %v397, 7
        %v399 = vstv %s396
        %v400 = vadd.s32 %v399, %v398
        %vm401 = vcmp.lt.s32.totalorder %v400, 20
        %v402 = vsel %vm401, 1, 0
        %vm403 = vcmp.eq.s32.totalorder %v402, 1
        %v404 = vsel %vm403, %v299, -inf
        %v405 = vsel %vm403, %v230, 0.0
        %v406 = vld [vmem:[#allocation2] sm:$0x1]
        %v407 = vsel %vm302, %v404, -inf
        %v408 = vrot.slane %v407, 4
        %v409 = vmax.f32 %v407, %v408
        %v410 = vrot.slane %v409, 2
        %v411 = vmax.f32 %v409, %v410
        %v412 = vrot.slane %v411, 1
        %v413 = vmax.f32 %v411, %v412
        %v414 = vmax.f32 %v406, %v413
        %v415 = vsub.f32 %v406, %v414
        %v416 = vmul.f32 %v415, 1.442695
        %v417 = vpow.pop %v416
        %v419 = vlaneseq
        %v420 = vshrl.u32 %v419, 7
        %v421 = vsub.s32 0, %v420
        %v422 = vrot.slane %v414, %v421
        %v424 = vsub.f32 %v404, %v422
        %v425 = vmul.f32 %v424, 1.442695
        %v426 = vpow.pop %v425
        %v427 = vld [vmem:[#allocation3] sm:$0x1]
        %v428 = vmul.f32 %v417, %v427
        %v429 = vsel %vm302, %v426, 0.0
        %v430 = vrot.slane %v429, 4
        %v431 = vadd.f32 %v429, %v430
        %v432 = vrot.slane %v431, 2
        %v433 = vadd.f32 %v431, %v432
        %v434 = vrot.slane %v433, 1
        %v435 = vadd.f32 %v433, %v434
        %v436 = vadd.f32 %v428, %v435
        %vm437 = vcmask 57344
        %438 = vst.msk [vmem:[#allocation3] sm:$0x1] %vm437, %v436
        %439 = vxpose.xlu0.b32.start [1/16] %v426, 128
        %440 = vxpose.xlu0.b32.cont [2/16] 0.0, 128
        %441 = vxpose.xlu0.b32.cont [3/16] 0.0, 128
        %442 = vxpose.xlu0.b32.cont [4/16] 0.0, 128
        %443 = vxpose.xlu0.b32.cont [5/16] 0.0, 128
        %444 = vxpose.xlu0.b32.cont [6/16] 0.0, 128
        %445 = vxpose.xlu0.b32.cont [7/16] 0.0, 128
        %446 = vxpose.xlu0.b32.cont [8/16] 0.0, 128
        %447 = vxpose.xlu0.b32.cont [9/16] 0.0, 128
        %448 = vxpose.xlu0.b32.cont [10/16] 0.0, 128
        %449 = vxpose.xlu0.b32.cont [11/16] 0.0, 128
        %450 = vxpose.xlu0.b32.cont [12/16] 0.0, 128
        %451 = vxpose.xlu0.b32.cont [13/16] 0.0, 128
        %452 = vxpose.xlu0.b32.cont [14/16] 0.0, 128
        %453 = vxpose.xlu0.b32.cont [15/16] 0.0, 128
        %454 = vxpose.xlu0.b32.end [16/16] 0.0, 128
        %v455 = vpop.trf.xlu0
        %v456 = vpop.trf.xlu0
        %v457 = vpop.trf.xlu0
        %v458 = vpop.trf.xlu0
        %v459 = vpop.trf.xlu0
        %v460 = vpop.trf.xlu0
        %v461 = vpop.trf.xlu0
        %v462 = vpop.trf.xlu0
        %v463 = vpop.trf.xlu0
        %v464 = vpop.trf.xlu0
        %v465 = vpop.trf.xlu0
        %v466 = vpop.trf.xlu0
        %v467 = vpop.trf.xlu0
        %v468 = vpop.trf.xlu0
        %v469 = vpop.trf.xlu0
        %v470 = vpop.trf.xlu0
        %v472 = vsel %vm302, %v455, 0
        %474 = vmatprep.subr.mxu0 0.0
        %475 = vmatpush1.msra.mxu0 0.0
        %476 = vmatprep.subr.mxu0 0.0
        %477 = vmatpush1.msra.mxu0 0.0
        %478 = vmatprep.subr.mxu0 0.0
        %479 = vmatpush1.msra.mxu0 0.0
        %480 = vmatprep.subr.mxu0 0.0
        %481 = vmatpush1.msra.mxu0 0.0
        %482 = vmatprep.subr.mxu0 0.0
        %483 = vmatpush1.msra.mxu0 0.0
        %484 = vmatprep.subr.mxu0 0.0
        %485 = vmatpush1.msra.mxu0 0.0
        %486 = vmatprep.subr.mxu0 0.0
        %487 = vmatpush1.msra.mxu0 0.0
        %488 = vmatprep.subr.mxu0 0.0
        %489 = vmatpush1.msra.mxu0 0.0
        %490 = vmatprep.subr.mxu0 0.0
        %491 = vmatpush1.msra.mxu0 0.0
        %492 = vmatprep.subr.mxu0 0.0
        %493 = vmatpush1.msra.mxu0 0.0
        %494 = vmatprep.subr.mxu0 0.0
        %495 = vmatpush1.msra.mxu0 0.0
        %496 = vmatprep.subr.mxu0 0.0
        %497 = vmatpush1.msra.mxu0 0.0
        %498 = vmatprep.subr.mxu0 0.0
        %499 = vmatpush1.msra.mxu0 0.0
        %500 = vmatprep.subr.mxu0 0.0
        %501 = vmatpush1.msra.mxu0 0.0
        %502 = vmatprep.subr.mxu0 0.0
        %503 = vmatpush1.msra.mxu0 0.0
        %504 = vmatprep.subr.mxu0 0.0
        %505 = vmatpush1.msra.mxu0 %v405
        %506 = vmatprep.subr.mxu0 0.0
        %507 = vmatpush2.msra.mxu0 0.0
        %508 = vmatprep.subr.mxu0 0.0
        %509 = vmatpush2.msra.mxu0 0.0
        %510 = vmatprep.subr.mxu0 0.0
        %511 = vmatpush2.msra.mxu0 0.0
        %512 = vmatprep.subr.mxu0 0.0
        %513 = vmatpush2.msra.mxu0 0.0
        %514 = vmatprep.subr.mxu0 0.0
        %515 = vmatpush2.msra.mxu0 0.0
        %516 = vmatprep.subr.mxu0 0.0
        %517 = vmatpush2.msra.mxu0 0.0
        %518 = vmatprep.subr.mxu0 0.0
        %519 = vmatpush2.msra.mxu0 0.0
        %520 = vmatprep.subr.mxu0 0.0
        %521 = vmatpush2.msra.mxu0 0.0
        %522 = vmatprep.subr.mxu0 0.0
        %523 = vmatpush2.msra.mxu0 0.0
        %524 = vmatprep.subr.mxu0 0.0
        %525 = vmatpush2.msra.mxu0 0.0
        %526 = vmatprep.subr.mxu0 0.0
        %527 = vmatpush2.msra.mxu0 0.0
        %528 = vmatprep.subr.mxu0 0.0
        %529 = vmatpush2.msra.mxu0 0.0
        %530 = vmatprep.subr.mxu0 0.0
        %531 = vmatpush2.msra.mxu0 0.0
        %532 = vmatprep.subr.mxu0 0.0
        %533 = vmatpush2.msra.mxu0 0.0
        %534 = vmatprep.subr.mxu0 0.0
        %535 = vmatpush2.msra.mxu0 0.0
        %536 = vmatprep.subr.mxu0 0.0
        %537 = vmatpush2.msra.mxu0 0.0
        %538 = vmatprep.mubr.f32.mxu0 0.0
        %539 = vmatmul.mubr.f32.gmra.mxu0 %v472
        %v540 = vpop.f32.mrf.mxu0
        %v541 = vadd.f32 0.0, %v540
        %v542 = vpop.f32.mrf.mxu0
        %543 = vdwg.mxu0
        %544 = vxpose.xlu0.b32.start [1/16] %v417, 128
        %545 = vxpose.xlu0.b32.cont [2/16] 0.0, 128
        %546 = vxpose.xlu0.b32.cont [3/16] 0.0, 128
        %547 = vxpose.xlu0.b32.cont [4/16] 0.0, 128
        %548 = vxpose.xlu0.b32.cont [5/16] 0.0, 128
        %549 = vxpose.xlu0.b32.cont [6/16] 0.0, 128
        %550 = vxpose.xlu0.b32.cont [7/16] 0.0, 128
        %551 = vxpose.xlu0.b32.cont [8/16] 0.0, 128
        %552 = vxpose.xlu0.b32.cont [9/16] 0.0, 128
        %553 = vxpose.xlu0.b32.cont [10/16] 0.0, 128
        %554 = vxpose.xlu0.b32.cont [11/16] 0.0, 128
        %555 = vxpose.xlu0.b32.cont [12/16] 0.0, 128
        %556 = vxpose.xlu0.b32.cont [13/16] 0.0, 128
        %557 = vxpose.xlu0.b32.cont [14/16] 0.0, 128
        %558 = vxpose.xlu0.b32.cont [15/16] 0.0, 128
        %559 = vxpose.xlu0.b32.end [16/16] 0.0, 128
        %v560 = vpop.trf.xlu0
        %v561 = vpop.trf.xlu0
        %v562 = vpop.trf.xlu0
        %v563 = vpop.trf.xlu0
        %v564 = vpop.trf.xlu0
        %v565 = vpop.trf.xlu0
        %v566 = vpop.trf.xlu0
        %v567 = vpop.trf.xlu0
        %v568 = vpop.trf.xlu0
        %v569 = vpop.trf.xlu0
        %v570 = vpop.trf.xlu0
        %v571 = vpop.trf.xlu0
        %v572 = vpop.trf.xlu0
        %v573 = vpop.trf.xlu0
        %v574 = vpop.trf.xlu0
        %v575 = vpop.trf.xlu0
        %v576 = vld [vmem:[#allocation4] sm:$0xff]
        %578 = vset.pattern.permute.xlu0 0
        %579 = vperm.xlu0 %578, %v560
        %v580 = vpop.permute.xlu0 %579
        %v582 = vmul.f32 %v580, %v576
        %v583 = vadd.f32 %v582, %v541
        %584 = vst [vmem:[#allocation4] sm:$0xff] %v583
        %585 = vst.msk [vmem:[#allocation2] sm:$0x1] %vm437, %v414
        %p586 = scmp.eq.s32.totalorder %s23, 2
        // Predicated region
        $region33: #{tpu_custom_call.1} parent=27 // pred_check
          %p587 = pneg %p586
        $region34: #{tpu_custom_call.1} parent=27 // pred_check_branch
          %589 = sbr.rel (%p587) target = $region36
        $region35: #{tpu_custom_call.1} parent=27 // pred_region
          %v590 = vld [vmem:[#allocation3] sm:$0x1]
          %v591 = vrcp.pop %v590
          %v592 = vld [vmem:[#allocation4] sm:$0xff]
          %593 = vxpose.xlu0.b32.start [1/16] %v591, 128
          %594 = vxpose.xlu0.b32.cont [2/16] 0.0, 128
          %595 = vxpose.xlu0.b32.cont [3/16] 0.0, 128
          %596 = vxpose.xlu0.b32.cont [4/16] 0.0, 128
          %597 = vxpose.xlu0.b32.cont [5/16] 0.0, 128
          %598 = vxpose.xlu0.b32.cont [6/16] 0.0, 128
          %599 = vxpose.xlu0.b32.cont [7/16] 0.0, 128
          %600 = vxpose.xlu0.b32.cont [8/16] 0.0, 128
          %601 = vxpose.xlu0.b32.cont [9/16] 0.0, 128
          %602 = vxpose.xlu0.b32.cont [10/16] 0.0, 128
          %603 = vxpose.xlu0.b32.cont [11/16] 0.0, 128
          %604 = vxpose.xlu0.b32.cont [12/16] 0.0, 128
          %605 = vxpose.xlu0.b32.cont [13/16] 0.0, 128
          %606 = vxpose.xlu0.b32.cont [14/16] 0.0, 128
          %607 = vxpose.xlu0.b32.cont [15/16] 0.0, 128
          %608 = vxpose.xlu0.b32.end [16/16] 0.0, 128
          %v609 = vpop.trf.xlu0
          %v610 = vpop.trf.xlu0
          %v611 = vpop.trf.xlu0
          %v612 = vpop.trf.xlu0
          %v613 = vpop.trf.xlu0
          %v614 = vpop.trf.xlu0
          %v615 = vpop.trf.xlu0
          %v616 = vpop.trf.xlu0
          %v617 = vpop.trf.xlu0
          %v618 = vpop.trf.xlu0
          %v619 = vpop.trf.xlu0
          %v620 = vpop.trf.xlu0
          %v621 = vpop.trf.xlu0
          %v622 = vpop.trf.xlu0
          %v623 = vpop.trf.xlu0
          %v624 = vpop.trf.xlu0
          %626 = vset.pattern.permute.xlu0 0
          %627 = vperm.xlu0 %626, %v609
          %v628 = vpop.permute.xlu0 %627
          %v630 = vmul.f32 %v592, %v628
          %631 = vst [vmem:[%s209] sm:$0xff] %v630
        $region36: #{tpu_custom_call.1} parent=27 // pred_fallthru
          _
        %p632 = scmp.lt.s32.totalorder %s22, 1
        %s633 = scalar_select %p632, %s22, 1
        %p634 = scmp.lt.s32.totalorder %s23, 2
        %s635 = scalar_select %p634, %s23, 2
        %s636 = smul.addr %s633, 3
        %s637 = sadd.s32 %s635, %s636
        %s638 = smul.addr %s637, 8
        %s639 = scalar_lea.vmem %s2, %s638
        %s640 = sand.u32 %s120, 1
        %s641 = scalar_lea.sflag [#allocation6], %s640
        %s642 = sand.u32 %s120, 1
        %s643 = smul.addr %s642, 8
        %s644 = scalar_lea.vmem [#allocation5], %s643
        // Predicated region
        $region37: #{tpu_custom_call.1} parent=27 // pred_check
          %p645 = pneg %p104
        $region38: #{tpu_custom_call.1} parent=27 // pred_check_branch
          %647 = sbr.rel (%p645) target = $region40
        $region39: #{tpu_custom_call.1} parent=27 // pred_region
          _
        $region40: #{tpu_custom_call.1} parent=27 // pred_fallthru
          _
        // Predicated region
        $region41: #{tpu_custom_call.1} parent=27 // pred_check
          %p648 = pneg %p130
        $region42: #{tpu_custom_call.1} parent=27 // pred_check_branch
          %650 = sbr.rel (%p648) target = $region44
        $region43: #{tpu_custom_call.1} parent=27 // pred_region
          %s652 = ssub.s32 128, 128
          %653 = vsyncadd %s641, %s652
          %s654 = smul.addr %s22, 128
          %s655 = scalar_lea.hbm %s3, %s654
          %s657 = sshll.u32 %s644, 4
          %s658 = int_to_ptr.vmem [resolvable:$true] %s657
          %660 = dma.vmem_to_hbm [thread:$0]  %s658, 128, %s655, %s641
        $region44: #{tpu_custom_call.1} parent=27 // pred_fallthru
          _
      $region28: #{tpu_custom_call.1} parent=5 // pred_fallthru
        _
      %p661 = scmp.le.s32.totalorder 2, %s13
      // Predicated region
      $region45: #{tpu_custom_call.1} parent=5 // pred_check
        %p662 = pneg %p661
      $region46: #{tpu_custom_call.1} parent=5 // pred_check_branch
        %664 = sbr.rel (%p662) target = $region48
      $region47: #{tpu_custom_call.1} parent=5 // pred_region
        %s665 = ssub.s32 %s13, 2
        // Predicated region
        $region49: #{tpu_custom_call.1} parent=47 // pred_check
          %p666 = pneg %p110
        $region50: #{tpu_custom_call.1} parent=47 // pred_check_branch
          %668 = sbr.rel (%p666) target = $region52
        $region51: #{tpu_custom_call.1} parent=47 // pred_region
          %p669 = scmp.lt.s32.totalorder %s24, 1
          %s670 = scalar_select %p669, %s24, 1
          %p671 = scmp.lt.s32.totalorder %s25, 2
          %s672 = scalar_select %p671, %s25, 2
          %s673 = smul.addr %s670, 3
          %s674 = sadd.s32 %s672, %s673
          %s675 = smul.addr %s674, 8
          %s676 = scalar_lea.vmem %s2, %s675
        $region52: #{tpu_custom_call.1} parent=47 // pred_fallthru
          _
        // Predicated region
        $region53: #{tpu_custom_call.1} parent=47 // pred_check
          %p677 = pneg %p136
        $region54: #{tpu_custom_call.1} parent=47 // pred_check_branch
          %679 = sbr.rel (%p677) target = $region56
        $region55: #{tpu_custom_call.1} parent=47 // pred_region
          %s680 = sand.u32 %s121, 1
          %s681 = scalar_lea.sflag [#allocation6], %s680
          %s682 = sand.u32 %s121, 1
          %s683 = smul.addr %s682, 8
          %s684 = scalar_lea.vmem [#allocation5], %s683
          %685 = dma.done %s681, 128
        $region56: #{tpu_custom_call.1} parent=47 // pred_fallthru
          _
      $region48: #{tpu_custom_call.1} parent=5 // pred_fallthru
        _
    $region6: #{tpu_custom_call.1} parent=1 // loop_footer
      %s17 = sadd.s32 1, %s13
    $region7: #{tpu_custom_call.1} parent=1 // loop_footer_branch
      %12 = sbr.rel target = $region3
    $region8: #{tpu_custom_call.1} parent=1 // loop_exit
      _
    %686 = vsyncpa [#allocation6], 1
    %s687 = scalar_lea.sflag [#allocation6], 1
    %688 = vsyncpa %s687, 1

</llo_original>
